<compile_context>
chip_gen: v7x
topology: tpu7x:2x2x1
jax: 0.10.0
libtpu: 0.0.40
codegen_flags: <defaults>
</compile_context>

<pallas_src>
import jax
import jax.numpy as jnp
from jax.experimental import pallas as pl
from jax.experimental.pallas import tpu as pltpu

_NEG_LARGE = -1e30                      # bias for padded vocab columns; exp() -> 0
_DEFAULT_VMEM_LIMIT = 48 * 1024 * 1024  # safe on v7x (64 MiB physical) and below


def _round_up(x, m):
    return (x + m - 1) // m * m


# ---------------------------------------------------------------------------
# Pass 1: per-row logsumexp over the tiled vocab axis (online max/sum).
# ---------------------------------------------------------------------------
def _lse_kernel(x_ref, w_ref, b_ref, lse_ref, m_scr, l_scr):
    j = pl.program_id(1)

    @pl.when(j == 0)
    def _():
        m_scr[...] = jnp.full(m_scr.shape, -jnp.inf, dtype=m_scr.dtype)
        l_scr[...] = jnp.zeros(l_scr.shape, dtype=l_scr.dtype)

    # bf16 operands, f32 accumulation on the MXU.
    z = jnp.dot(x_ref[...], w_ref[...], preferred_element_type=jnp.float32)
    z = z + b_ref[...]                      # (1, tn) f32 bias broadcasts over rows
    m_new = jnp.maximum(m_scr[...], jnp.max(z, axis=-1, keepdims=True))
    l_scr[...] = (l_scr[...] * jnp.exp(m_scr[...] - m_new)
                  + jnp.sum(jnp.exp(z - m_new), axis=-1, keepdims=True))
    m_scr[...] = m_new

    @pl.when(j == pl.num_programs(1) - 1)
    def _():
        lse_ref[...] = (m_scr[...] + jnp.log(l_scr[...])).astype(lse_ref.dtype)


# ---------------------------------------------------------------------------
# Pass 2: recompute the logit tile and subtract the (already computed) lse.
# Grid order (vocab, rows): the weight tile is resident across the inner loop.
# ---------------------------------------------------------------------------
def _out_kernel(x_ref, w_ref, b_ref, lse_ref, o_ref):
    z = jnp.dot(x_ref[...], w_ref[...], preferred_element_type=jnp.float32)
    z = z + b_ref[...]
    o_ref[...] = (z - lse_ref[...]).astype(o_ref.dtype)


def prepare_mlm_head(w, b, *, tn=512, param_dtype=jnp.bfloat16):
    """Pad / cast the MLM weight once, outside the per-step hot path.

    w: [H, V], b: [V] -> dict holding the padded bf16 weight, padded f32 bias
    (as [1, Vp]), the vocab tile size actually used and the true vocab size.
    Invariant: Vp - V < tn, so the padded vocab tail never fills a whole tile.
    """
    V = w.shape[1]
    tn = min(tn, _round_up(V, 128))
    Vp = _round_up(V, tn)
    w_p = jnp.pad(w, ((0, 0), (0, Vp - V))).astype(param_dtype)
    b_p = jnp.pad(b.astype(jnp.float32), (0, Vp - V),
                  constant_values=_NEG_LARGE).reshape(1, Vp)
    return {"w": w_p, "b": b_p, "tn": tn, "vocab": V}


def linear_log_softmax(x, mlm_params, *, tm=512,
                       out_dtype=jnp.bfloat16,
                       vmem_limit_bytes=_DEFAULT_VMEM_LIMIT):
    """log_softmax(x @ W + b, axis=-1) with a vocab-tiled two-pass Pallas scheme.

    x: [M, H] (any float dtype; cast to the weight dtype for the MXU),
    mlm_params: output of prepare_mlm_head  ->  [M, V] in `out_dtype`.
    """
    w_p, b2 = mlm_params["w"], mlm_params["b"]
    tn, V = mlm_params["tn"], mlm_params["vocab"]
    M, H = x.shape
    Vp = w_p.shape[1]

    # Row tile: 256-multiples for the 256x256 MXUs on v6e/v7x; make sure there
    # are at least 2 row tiles (second TensorCore on v7x) when M allows it.
    tm = min(tm, _round_up(M, 256))
    if M > 256 and _round_up(M, tm) // tm < 2:
        tm = max(256, tm // 2)
    Mp = _round_up(M, tm)

    x_p = x.astype(w_p.dtype)               # bf16 operands; accumulation stays f32
    if Mp != M:
        x_p = jnp.pad(x_p, ((0, Mp - M), (0, 0)))

    row_tiles, vocab_tiles = Mp // tm, Vp // tn

    # Pass 1: online logsumexp per row tile (vocab axis is the reduction).
    lse = pl.pallas_call(
        _lse_kernel,
        out_shape=jax.ShapeDtypeStruct((Mp, 1), jnp.float32),
        grid_spec=pltpu.PrefetchScalarGridSpec(
            num_scalar_prefetch=0,
            grid=(row_tiles, vocab_tiles),
            in_specs=[
                pl.BlockSpec((tm, H), lambda i, j: (i, 0)),   # x row tile (resident)
                pl.BlockSpec((H, tn), lambda i, j: (0, j)),   # streamed weight tile
                pl.BlockSpec((1, tn), lambda i, j: (0, j)),   # bias tile (f32)
            ],
            out_specs=pl.BlockSpec((tm, 1), lambda i, j: (i, 0)),
            scratch_shapes=[pltpu.VMEM((tm, 1), jnp.float32),   # running max
                            pltpu.VMEM((tm, 1), jnp.float32)],  # running sum
        ),
        compiler_params=pltpu.CompilerParams(
            dimension_semantics=("parallel", "arbitrary"),
            vmem_limit_bytes=vmem_limit_bytes),
    )(x_p, w_p, b2)

    # Pass 2: W-resident grid order -> each (H, tn) weight tile is DMA'd once.
    out = pl.pallas_call(
        _out_kernel,
        out_shape=jax.ShapeDtypeStruct((Mp, Vp), out_dtype),
        grid_spec=pltpu.PrefetchScalarGridSpec(
            num_scalar_prefetch=0,
            grid=(vocab_tiles, row_tiles),
            in_specs=[
                pl.BlockSpec((tm, H), lambda j, i: (i, 0)),   # x streams on inner axis
                pl.BlockSpec((H, tn), lambda j, i: (0, j)),   # W resident per outer step
                pl.BlockSpec((1, tn), lambda j, i: (0, j)),
                pl.BlockSpec((tm, 1), lambda j, i: (i, 0)),   # per-row lse
            ],
            out_specs=pl.BlockSpec((tm, tn), lambda j, i: (i, j)),
        ),
        compiler_params=pltpu.CompilerParams(
            dimension_semantics=("parallel", "parallel"),
            vmem_limit_bytes=vmem_limit_bytes),
    )(x_p, w_p, b2, lse)

    return out[:M, :V]


# ---------------------------------------------------------------------------
# NextSentencePrediction head: N = 2 -> plain JAX (per review, a Pallas kernel
# padded to 128 lanes wastes 64x of the MXU and launch overhead dominates;
# XLA fuses this trivially).
# ---------------------------------------------------------------------------
def next_sentence_head(x_cls, w, b):
    """x_cls: [B, H], w: [H, 2], b: [2] -> log_softmax(x_cls @ w + b): [B, 2]."""
    return jax.nn.log_softmax(x_cls @ w + b, axis=-1)


def bert_lm_heads(x_hidden, w_nsp, b_nsp, mlm_params, *, out_dtype=jnp.bfloat16):
    """Forward of the BERTLM heads given BERT hidden states [B, S, H].

    mlm_params is the output of prepare_mlm_head (pre-padded / pre-cast weight).
    Returns (next_sentence: [B, 2] f32, mask_lm: [B, S, V] out_dtype) log-probs.
    """
    B, S, H = x_hidden.shape
    V = mlm_params["vocab"]

    # MaskedLanguageModel over every token.
    mlm = linear_log_softmax(x_hidden.reshape(B * S, H), mlm_params,
                             out_dtype=out_dtype)
    mlm = mlm.reshape(B, S, V)

    # NextSentencePrediction on the [CLS] token x[:, 0].
    nsp = next_sentence_head(x_hidden[:, 0, :], w_nsp, b_nsp)
    return nsp, mlm


def _init_linear(key, fan_in, fan_out):
    """Deterministic init mimicking nn.Linear (uniform +/- 1/sqrt(fan_in))."""
    kw, kb = jax.random.split(key)
    bound = 1.0 / jnp.sqrt(fan_in)
    w = jax.random.uniform(kw, (fan_in, fan_out), jnp.float32, -bound, bound)
    b = jax.random.uniform(kb, (fan_out,), jnp.float32, -bound, bound)
    return w, b


if __name__ == "__main__":
    # Small synthetic shapes; V deliberately not a multiple of 128 and B*S not a
    # multiple of the row tile to exercise the padding / tiling paths.
    B, S, H, V = 2, 8, 32, 1000

    key = jax.random.PRNGKey(0)
    k_x, k_nsp, k_mlm = jax.random.split(key, 3)

    # BERT encoder output hidden states (synthetic; encoder itself not provided).
    x_hidden = jax.random.normal(k_x, (B, S, H), jnp.float32)
    # segment_label would be consumed by the (absent) BERT encoder.
    segment_label = jnp.zeros((B, S), jnp.int32)  # noqa: F841

    w_nsp, b_nsp = _init_linear(k_nsp, H, 2)
    w_mlm, b_mlm = _init_linear(k_mlm, H, V)

    # Pad / cast the big MLM weight once, off the per-step hot path.
    mlm_params = prepare_mlm_head(w_mlm, b_mlm)

    nsp, mlm = bert_lm_heads(x_hidden, w_nsp, b_nsp, mlm_params)
    nsp = jax.block_until_ready(nsp)
    mlm = jax.block_until_ready(mlm)
    assert nsp.shape == (B, 2) and mlm.shape == (B, S, V)

    # Correctness checks. The MLM head now uses bf16 MXU operands and a bf16
    # output, so compare against a bf16-operand / f32-accumulation reference
    # with a bf16-appropriate tolerance.
    ref_nsp = jax.nn.log_softmax(x_hidden[:, 0] @ w_nsp + b_nsp, axis=-1)
    ref_logits = jnp.dot(x_hidden.reshape(B * S, H).astype(jnp.bfloat16),
                         w_mlm.astype(jnp.bfloat16),
                         preferred_element_type=jnp.float32) + b_mlm
    ref_mlm = jax.nn.log_softmax(ref_logits, axis=-1).reshape(B, S, V)

    assert jnp.allclose(nsp, ref_nsp, atol=1e-5), "NSP head mismatch"
    assert jnp.allclose(mlm.astype(jnp.float32), ref_mlm, atol=1e-1), "MLM head mismatch"

    print("KERNEL_OK")
</pallas_src>

<mosaic_0001>
module attributes {stable_mosaic.version = 11 : i64} {
  func.func @_lse_kernel(%arg0: i32, %arg1: i32, %arg2: memref<256x32xbf16, #tpu.memory_space<vmem>>, %arg3: memref<32x512xbf16, #tpu.memory_space<vmem>>, %arg4: memref<1x512xf32, #tpu.memory_space<vmem>>, %arg5: memref<256x1xf32, #tpu.memory_space<vmem>>, %arg6: memref<256x1xf32, #tpu.memory_space<vmem>>, %arg7: memref<256x1xf32, #tpu.memory_space<vmem>>) attributes {dimension_semantics = [#tpu.dimension_semantics<parallel>, #tpu.dimension_semantics<arbitrary>], iteration_bounds = array<i64: 1, 2>, scalar_prefetch = 0 : i64, scratch_operands = 2 : i64, tpu.core_type = #tpu.core_type<tc>, window_params = [{transform_indices = @transform_0, window_bounds = array<i64: 256, 32>}, {transform_indices = @transform_1, window_bounds = array<i64: 32, 512>}, {transform_indices = @transform_2, window_bounds = array<i64: 1, 512>}, {transform_indices = @transform_3, window_bounds = array<i64: 256, 1>}]} {
    %c0_i32 = arith.constant 0 : i32
    %0 = arith.cmpi eq, %arg1, %c0_i32 : i32
    %1 = arith.extui %0 : i1 to i32
    %c0_i32_0 = arith.constant 0 : i32
    %2 = arith.cmpi ne, %1, %c0_i32_0 : i32
    scf.if %2 {
      %cst_19 = arith.constant 0xFF800000 : f32
      %29 = vector.broadcast %cst_19 : f32 to vector<256x1xf32>
      %c0_20 = arith.constant 0 : index
      %c0_21 = arith.constant 0 : index
      %30 = vector.load %arg6[%c0_20, %c0_21] : memref<256x1xf32, #tpu.memory_space<vmem>>, vector<256x1xf32>
      tpu.vector_store %arg6[%c0_20, %c0_21], %29 {strides = array<i32>} : memref<256x1xf32, #tpu.memory_space<vmem>>, vector<256x1xf32>,
      %cst_22 = arith.constant 0.000000e+00 : f32
      %31 = vector.broadcast %cst_22 : f32 to vector<256x1xf32>
      %c0_23 = arith.constant 0 : index
      %c0_24 = arith.constant 0 : index
      %32 = vector.load %arg7[%c0_23, %c0_24] : memref<256x1xf32, #tpu.memory_space<vmem>>, vector<256x1xf32>
      tpu.vector_store %arg7[%c0_23, %c0_24], %31 {strides = array<i32>} : memref<256x1xf32, #tpu.memory_space<vmem>>, vector<256x1xf32>,
    } else {
    }
    %c0 = arith.constant 0 : index
    %c0_1 = arith.constant 0 : index
    %3 = vector.load %arg2[%c0, %c0_1] : memref<256x32xbf16, #tpu.memory_space<vmem>>, vector<256x32xbf16>
    %c0_2 = arith.constant 0 : index
    %c0_3 = arith.constant 0 : index
    %4 = vector.load %arg3[%c0_2, %c0_3] : memref<32x512xbf16, #tpu.memory_space<vmem>>, vector<32x512xbf16>
    %cst = arith.constant dense<0.000000e+00> : vector<256x512xf32>
    %5 = tpu.matmul %3, %4, %cst {dimension_numbers = #tpu.dot_dimension_numbers<[1], [0], [0], [1], [0, 0, 1, 1], [], []>} : vector<256x32xbf16>, vector<32x512xbf16>, vector<256x512xf32> -> vector<256x512xf32>
    %c0_4 = arith.constant 0 : index
    %c0_5 = arith.constant 0 : index
    %6 = vector.load %arg4[%c0_4, %c0_5] : memref<1x512xf32, #tpu.memory_space<vmem>>, vector<1x512xf32>
    %7 = vector.broadcast %6 : vector<1x512xf32> to vector<256x512xf32>
    %8 = arith.addf %5, %7 : vector<256x512xf32>
    %c0_6 = arith.constant 0 : index
    %c0_7 = arith.constant 0 : index
    %9 = vector.load %arg6[%c0_6, %c0_7] : memref<256x1xf32, #tpu.memory_space<vmem>>, vector<256x1xf32>
    %cst_8 = arith.constant dense<0xFF800000> : vector<256xf32>
    %10 = vector.multi_reduction <maximumf>, %8, %cst_8 [1] : vector<256x512xf32> to vector<256xf32>
    %11 = vector.shape_cast %10 : vector<256xf32> to vector<256x1xf32>
    %12 = arith.maximumf %9, %11 : vector<256x1xf32>
    %c0_9 = arith.constant 0 : index
    %c0_10 = arith.constant 0 : index
    %13 = vector.load %arg7[%c0_9, %c0_10] : memref<256x1xf32, #tpu.memory_space<vmem>>, vector<256x1xf32>
    %c0_11 = arith.constant 0 : index
    %c0_12 = arith.constant 0 : index
    %14 = vector.load %arg6[%c0_11, %c0_12] : memref<256x1xf32, #tpu.memory_space<vmem>>, vector<256x1xf32>
    %15 = arith.subf %14, %12 : vector<256x1xf32>
    %16 = math.exp %15 : vector<256x1xf32>
    %17 = arith.mulf %13, %16 : vector<256x1xf32>
    %18 = vector.broadcast %12 : vector<256x1xf32> to vector<256x512xf32>
    %19 = arith.subf %8, %18 : vector<256x512xf32>
    %20 = math.exp %19 : vector<256x512xf32>
    %cst_13 = arith.constant dense<0.000000e+00> : vector<256xf32>
    %21 = vector.multi_reduction <add>, %20, %cst_13 [1] : vector<256x512xf32> to vector<256xf32>
    %22 = vector.shape_cast %21 : vector<256xf32> to vector<256x1xf32>
    %23 = arith.addf %17, %22 : vector<256x1xf32>
    %c0_14 = arith.constant 0 : index
    %c0_15 = arith.constant 0 : index
    %24 = vector.load %arg7[%c0_14, %c0_15] : memref<256x1xf32, #tpu.memory_space<vmem>>, vector<256x1xf32>
    tpu.vector_store %arg7[%c0_14, %c0_15], %23 {strides = array<i32>} : memref<256x1xf32, #tpu.memory_space<vmem>>, vector<256x1xf32>,
    %c0_16 = arith.constant 0 : index
    %c0_17 = arith.constant 0 : index
    %25 = vector.load %arg6[%c0_16, %c0_17] : memref<256x1xf32, #tpu.memory_space<vmem>>, vector<256x1xf32>
    tpu.vector_store %arg6[%c0_16, %c0_17], %12 {strides = array<i32>} : memref<256x1xf32, #tpu.memory_space<vmem>>, vector<256x1xf32>,
    %c1_i32 = arith.constant 1 : i32
    %26 = arith.cmpi eq, %arg1, %c1_i32 : i32
    %27 = arith.extui %26 : i1 to i32
    %c0_i32_18 = arith.constant 0 : i32
    %28 = arith.cmpi ne, %27, %c0_i32_18 : i32
    scf.if %28 {
      %c0_19 = arith.constant 0 : index
      %c0_20 = arith.constant 0 : index
      %29 = vector.load %arg6[%c0_19, %c0_20] : memref<256x1xf32, #tpu.memory_space<vmem>>, vector<256x1xf32>
      %c0_21 = arith.constant 0 : index
      %c0_22 = arith.constant 0 : index
      %30 = vector.load %arg7[%c0_21, %c0_22] : memref<256x1xf32, #tpu.memory_space<vmem>>, vector<256x1xf32>
      %31 = math.log %30 : vector<256x1xf32>
      %32 = arith.addf %29, %31 : vector<256x1xf32>
      %c0_23 = arith.constant 0 : index
      %c0_24 = arith.constant 0 : index
      %33 = vector.load %arg5[%c0_23, %c0_24] : memref<256x1xf32, #tpu.memory_space<vmem>>, vector<256x1xf32>
      tpu.vector_store %arg5[%c0_23, %c0_24], %32 {strides = array<i32>} : memref<256x1xf32, #tpu.memory_space<vmem>>, vector<256x1xf32>,
    } else {
    }
    return
  }
  func.func @transform_0(%arg0: i32, %arg1: i32) -> (i32, i32) {
    %c0_i32 = arith.constant 0 : i32
    %c0_i32_0 = arith.constant 0 : i32
    return %arg0, %c0_i32 : i32, i32
  }
  func.func @transform_1(%arg0: i32, %arg1: i32) -> (i32, i32) {
    %c0_i32 = arith.constant 0 : i32
    %c0_i32_0 = arith.constant 0 : i32
    return %c0_i32, %arg1 : i32, i32
  }
  func.func @transform_2(%arg0: i32, %arg1: i32) -> (i32, i32) {
    %c0_i32 = arith.constant 0 : i32
    %c0_i32_0 = arith.constant 0 : i32
    return %c0_i32, %arg1 : i32, i32
  }
  func.func @transform_3(%arg0: i32, %arg1: i32) -> (i32, i32) {
    %c0_i32 = arith.constant 0 : i32
    %c0_i32_0 = arith.constant 0 : i32
    return %arg0, %c0_i32 : i32, i32
  }
}

</mosaic_0001>

<llo_original>
// kernel: tpu_custom_call.1
$region0: #{tpu_custom_call.1}
  #allocation0 [shape = 'u32[]', space=smem, size = 0x4, offset = 0x4, fixed_abs, tag = 'smem constant byte address 0x4 - core index']
  #allocation1 [shape = 'u32[144,128]{1,0:T(1,128)}', space=vmem, size = 0x12000, scoped, tag = 'internal scratch']
  #allocation2 [shape = 'f32[256,1]{1,0:T(8,128)}', space=vmem, size = 0x20000, scoped, tag = 'scratch operand']
  #allocation3 [shape = 'f32[256,1]{1,0:T(8,128)}', space=vmem, size = 0x20000, scoped, tag = 'scratch operand']
  %s0 = inlined_call_operand.vmem [shape: bf16[256,32], index: 0, kind: input, shape index: {}]
  %s1 = inlined_call_operand.vmem [shape: bf16[32,1024], index: 1, kind: input, shape index: {}]
  %s2 = inlined_call_operand.vmem [shape: f32[1,1024], index: 2, kind: input, shape index: {}]
  %s3 = inlined_call_operand.vmem [shape: f32[256,1], index: 3, kind: output, shape index: {}]
  %s4 = sld [smem:[#allocation0]]
  $region76: #{tpu_custom_call.1} parent=0
    _
  %s6 = ssub.s32 1, %s4
  %s7 = scalar_select 0, %s6, %s4
  $region1: #{tpu_custom_call.1} parent=0
    #allocation4 [shape = 'u8[65536]{0}', space=vmem, size = 0x10000, scoped, tag = 'input window, operand 1']
    loop: start=0, step=1, limit=4
    $region2: #{tpu_custom_call.1} parent=1 // loop_pre_header
      _
    $region3: #{tpu_custom_call.1} parent=1 // loop_header
      %s9 = sphi 0, %s13
      %p10 = scmp.ge.s32.totalorder %s9, 4
      %s16 = sphi 0, %s28
      %s17 = sphi 0, %s24
      %s18 = sphi 0, %s16
      %s19 = sphi 0, %s17
      %s20 = sphi 0, %s18
      %s21 = sphi 0, %s19
      %s31 = sphi 0, %s33
      %s34 = sphi 0, %s31
      %s35 = sphi 0, %s34
      %s51 = sphi 0, %s35
      %s57 = sphi 0, %s59
      %s60 = sphi 0, %s57
      %s61 = sphi 0, %s60
      %s77 = sphi 0, %s61
      %s83 = sphi 0, %s85
      %s86 = sphi 0, %s83
      %s87 = sphi 0, %s86
      %s103 = sphi 0, %s87
      %s109 = sphi 0, %s111
      %s112 = sphi 0, %s109
      %s113 = sphi 0, %s112
      %s129 = sphi 0, %s113
    $region4: #{tpu_custom_call.1} parent=1 // loop_header_branch
      %12 = sbr.rel (%p10) target = $region8
    $region5: #{tpu_custom_call.1} parent=1 // loop_body
      %s14 = ssub.s32 %s9, 1
      %s15 = ssub.s32 %s9, 2
      %s22 = sadd.s32 1, %s17
      %p23 = scmp.ge.s32.totalorder %s22, 2
      %s24 = scalar_select %p23, 0, %s22
      %s25 = sadd.s32 1, %s16
      %s26 = scalar_select %p23, %s25, %s16
      %p27 = scmp.ge.s32.totalorder %s26, 1
      %s28 = scalar_select %p27, 0, %s26
      %s29 = ssub.s32 %s16, %s28
      %p30 = scmp.eq.s32.totalorder %s29, 0
      %s32 = sadd.s32 %s31, 1
      %s33 = scalar_select %p30, %s31, %s32
      %p36 = pneg %p30
      %p37 = scmp.eq.s32.totalorder %s9, 1
      %p38 = por %p36, %p37
      %p39 = scmp.ne.s32.totalorder %s31, %s34
      %p40 = scmp.eq.s32.totalorder %s9, 0
      %p41 = por %p39, %p40
      %p42 = scmp.ne.s32.totalorder %s31, %s34
      %p43 = scmp.eq.s32.totalorder %s14, 1
      %p44 = por %p42, %p43
      %p45 = scmp.ne.s32.totalorder %s34, %s35
      %p46 = scmp.eq.s32.totalorder %s14, 0
      %p47 = por %p45, %p46
      %p48 = scmp.ne.s32.totalorder %s34, %s35
      %p49 = scmp.eq.s32.totalorder %s15, 1
      %p50 = por %p48, %p49
      %p52 = scmp.ne.s32.totalorder %s35, %s51
      %p53 = scmp.eq.s32.totalorder %s15, 0
      %p54 = por %p52, %p53
      %s55 = ssub.s32 %s17, %s24
      %p56 = scmp.eq.s32.totalorder %s55, 0
      %s58 = sadd.s32 %s57, 1
      %s59 = scalar_select %p56, %s57, %s58
      %p62 = pneg %p56
      %p63 = scmp.eq.s32.totalorder %s9, 1
      %p64 = por %p62, %p63
      %p65 = scmp.ne.s32.totalorder %s57, %s60
      %p66 = scmp.eq.s32.totalorder %s9, 0
      %p67 = por %p65, %p66
      %p68 = scmp.ne.s32.totalorder %s57, %s60
      %p69 = scmp.eq.s32.totalorder %s14, 1
      %p70 = por %p68, %p69
      %p71 = scmp.ne.s32.totalorder %s60, %s61
      %p72 = scmp.eq.s32.totalorder %s14, 0
      %p73 = por %p71, %p72
      %p74 = scmp.ne.s32.totalorder %s60, %s61
      %p75 = scmp.eq.s32.totalorder %s15, 1
      %p76 = por %p74, %p75
      %p78 = scmp.ne.s32.totalorder %s61, %s77
      %p79 = scmp.eq.s32.totalorder %s15, 0
      %p80 = por %p78, %p79
      %s81 = ssub.s32 %s17, %s24
      %p82 = scmp.eq.s32.totalorder %s81, 0
      %s84 = sadd.s32 %s83, 1
      %s85 = scalar_select %p82, %s83, %s84
      %p88 = pneg %p82
      %p89 = scmp.eq.s32.totalorder %s9, 1
      %p90 = por %p88, %p89
      %p91 = scmp.ne.s32.totalorder %s83, %s86
      %p92 = scmp.eq.s32.totalorder %s9, 0
      %p93 = por %p91, %p92
      %p94 = scmp.ne.s32.totalorder %s83, %s86
      %p95 = scmp.eq.s32.totalorder %s14, 1
      %p96 = por %p94, %p95
      %p97 = scmp.ne.s32.totalorder %s86, %s87
      %p98 = scmp.eq.s32.totalorder %s14, 0
      %p99 = por %p97, %p98
      %p100 = scmp.ne.s32.totalorder %s86, %s87
      %p101 = scmp.eq.s32.totalorder %s15, 1
      %p102 = por %p100, %p101
      %p104 = scmp.ne.s32.totalorder %s87, %s103
      %p105 = scmp.eq.s32.totalorder %s15, 0
      %p106 = por %p104, %p105
      %s107 = ssub.s32 %s16, %s28
      %p108 = scmp.eq.s32.totalorder %s107, 0
      %s110 = sadd.s32 %s109, 1
      %s111 = scalar_select %p108, %s109, %s110
      %p114 = pneg %p108
      %p115 = scmp.eq.s32.totalorder %s9, 1
      %p116 = por %p114, %p115
      %p117 = scmp.ne.s32.totalorder %s109, %s112
      %p118 = scmp.eq.s32.totalorder %s9, 0
      %p119 = por %p117, %p118
      %p120 = scmp.ne.s32.totalorder %s109, %s112
      %p121 = scmp.eq.s32.totalorder %s14, 1
      %p122 = por %p120, %p121
      %p123 = scmp.ne.s32.totalorder %s112, %s113
      %p124 = scmp.eq.s32.totalorder %s14, 0
      %p125 = por %p123, %p124
      %p126 = scmp.ne.s32.totalorder %s112, %s113
      %p127 = scmp.eq.s32.totalorder %s15, 1
      %p128 = por %p126, %p127
      %p130 = scmp.ne.s32.totalorder %s113, %s129
      %p131 = scmp.eq.s32.totalorder %s15, 0
      %p132 = por %p130, %p131
      %p133 = scmp.le.s32.totalorder 1, %s9
      %p134 = scmp.lt.s32.totalorder %s9, 3
      %p135 = pnand %p133, %p134
      %p136 = pneg %p135
      // Predicated region
      $region9: #{tpu_custom_call.1} parent=5 // pred_check
        _
      $region10: #{tpu_custom_call.1} parent=5 // pred_check_branch
        %138 = sbr.rel (%p135) target = $region12
      $region11: #{tpu_custom_call.1} parent=5 // pred_region
        %s139 = ssub.s32 %s9, 1
        // Predicated region
        $region13: #{tpu_custom_call.1} parent=11 // pred_check
          %p140 = pneg %p47
        $region14: #{tpu_custom_call.1} parent=11 // pred_check_branch
          %142 = sbr.rel (%p140) target = $region16
        $region15: #{tpu_custom_call.1} parent=11 // pred_region
          %s143 = smul.u32 32, %s18
          %p144 = scmp.lt.s32.totalorder %s143, 31
          %s145 = scalar_select %p144, %s143, 31
          %s146 = smul.addr %s145, 4
          %s147 = scalar_lea.vmem %s0, %s146
          %s148 = smul.u32 32, %s18
        $region16: #{tpu_custom_call.1} parent=11 // pred_fallthru
          _
      $region12: #{tpu_custom_call.1} parent=5 // pred_fallthru
        _
      %p149 = scmp.lt.s32.totalorder %s9, 2
      // Predicated region
      $region17: #{tpu_custom_call.1} parent=5 // pred_check
        %p150 = pneg %p149
      $region18: #{tpu_custom_call.1} parent=5 // pred_check_branch
        %152 = sbr.rel (%p150) target = $region20
      $region19: #{tpu_custom_call.1} parent=5 // pred_region
        // Predicated region
        $region21: #{tpu_custom_call.1} parent=19 // pred_check
          %p153 = pneg %p67
        $region22: #{tpu_custom_call.1} parent=19 // pred_check_branch
          %155 = sbr.rel (%p153) target = $region24
        $region23: #{tpu_custom_call.1} parent=19 // pred_region
          %s156 = sand.u32 %s57, 1
          %s157 = sand.u32 %s57, 1
          %s158 = smul.addr %s157, 64
          %s159 = scalar_lea.vmem [#allocation4], %s158
          %s160 = smul.u32 4, %s17
          %s161 = smul.addr %s160, 4
          %s162 = scalar_lea.vmem %s1, %s161
          // Predicated region
          $region25: #{tpu_custom_call.1} parent=23 // pred_check
            _
          $region26: #{tpu_custom_call.1} parent=23 // pred_check_branch
            %164 = sbr.rel (0) target = $region28
          $region27: #{tpu_custom_call.1} parent=23 // pred_region
            // Predicated region
            $region29: #{tpu_custom_call.1} parent=27 // pred_check
              _
            $region30: #{tpu_custom_call.1} parent=27 // pred_check_branch
              %166 = sbr.rel (0) target = $region32
            $region31: #{tpu_custom_call.1} parent=27 // pred_region
              loop: start=0, step=1, limit=1
              $region33: #{tpu_custom_call.1} parent=31 // loop_pre_header
                _
              $region34: #{tpu_custom_call.1} parent=31 // loop_header
                %s168 = sphi 0, %s172
                %p169 = scmp.ge.s32.totalorder %s168, 1
                %s173 = sphi %s162, %s162
                %s174 = sphi %s159, %s159
              $region35: #{tpu_custom_call.1} parent=31 // loop_header_branch
                %171 = sbr.rel (%p169) target = $region39
              $region36: #{tpu_custom_call.1} parent=31 // loop_body
                %v175 = vld [vmem:[%s173] sm:$0xff]
                %176 = vst [vmem:[%s174] sm:$0xff] %v175
                %v177 = vld [vmem:[%s173 + $0x8] sm:$0xff]
                %178 = vst [vmem:[%s174 + $0x8] sm:$0xff] %v177
                %v179 = vld [vmem:[%s173 + $0x20] sm:$0xff]
                %180 = vst [vmem:[%s174 + $0x10] sm:$0xff] %v179
                %v181 = vld [vmem:[%s173 + $0x28] sm:$0xff]
                %182 = vst [vmem:[%s174 + $0x18] sm:$0xff] %v181
                %v183 = vld [vmem:[%s173 + $0x40] sm:$0xff]
                %184 = vst [vmem:[%s174 + $0x20] sm:$0xff] %v183
                %v185 = vld [vmem:[%s173 + $0x48] sm:$0xff]
                %186 = vst [vmem:[%s174 + $0x28] sm:$0xff] %v185
                %v187 = vld [vmem:[%s173 + $0x60] sm:$0xff]
                %188 = vst [vmem:[%s174 + $0x30] sm:$0xff] %v187
                %v189 = vld [vmem:[%s173 + $0x68] sm:$0xff]
                %190 = vst [vmem:[%s174 + $0x38] sm:$0xff] %v189
              $region37: #{tpu_custom_call.1} parent=31 // loop_footer
                %s172 = sadd.s32 1, %s168
              $region38: #{tpu_custom_call.1} parent=31 // loop_footer_branch
                %167 = sbr.rel target = $region34
              $region39: #{tpu_custom_call.1} parent=31 // loop_exit
                _
            $region32: #{tpu_custom_call.1} parent=27 // pred_fallthru
              _
            // Predicated region
            $region40: #{tpu_custom_call.1} parent=27 // pred_check
              _
            $region41: #{tpu_custom_call.1} parent=27 // pred_check_branch
              %192 = sbr.rel target = $region43
            $region42: #{tpu_custom_call.1} parent=27 // pred_region
              _
            $region43: #{tpu_custom_call.1} parent=27 // pred_fallthru
              _
          $region28: #{tpu_custom_call.1} parent=23 // pred_fallthru
            _
          %193 = vnop
        $region24: #{tpu_custom_call.1} parent=19 // pred_fallthru
          _
        // Predicated region
        $region44: #{tpu_custom_call.1} parent=19 // pred_check
          %p194 = pneg %p93
        $region45: #{tpu_custom_call.1} parent=19 // pred_check_branch
          %196 = sbr.rel (%p194) target = $region47
        $region46: #{tpu_custom_call.1} parent=19 // pred_region
          %s197 = smul.u32 4, %s17
          %p198 = scmp.lt.s32.totalorder %s197, 7
          %s199 = scalar_select %p198, %s197, 7
          %s200 = scalar_lea.vmem %s2, %s199
          %s201 = smul.u32 4, %s17
        $region47: #{tpu_custom_call.1} parent=19 // pred_fallthru
          _
      $region20: #{tpu_custom_call.1} parent=5 // pred_fallthru
        _
      %p202 = scmp.le.s32.totalorder 1, %s9
      %p203 = scmp.lt.s32.totalorder %s9, 3
      %p204 = pnand %p202, %p203
      %p205 = pneg %p204
      // Predicated region
      $region48: #{tpu_custom_call.1} parent=5 // pred_check
        _
      $region49: #{tpu_custom_call.1} parent=5 // pred_check_branch
        %207 = sbr.rel (%p204) target = $region51
      $region50: #{tpu_custom_call.1} parent=5 // pred_region
        %s208 = ssub.s32 %s9, 1
        %s209 = sand.u32 %s60, 1
        %s210 = sand.u32 %s60, 1
        %s211 = smul.addr %s210, 64
        %s212 = scalar_lea.vmem [#allocation4], %s211
        // Predicated region
        $region52: #{tpu_custom_call.1} parent=50 // pred_check
          %p213 = pneg %p73
        $region53: #{tpu_custom_call.1} parent=50 // pred_check_branch
          %215 = sbr.rel (%p213) target = $region55
        $region54: #{tpu_custom_call.1} parent=50 // pred_region
          _
        $region55: #{tpu_custom_call.1} parent=50 // pred_fallthru
          _
        %s216 = smul.u32 32, %s18
        %p217 = scmp.lt.s32.totalorder %s216, 31
        %s218 = scalar_select %p217, %s216, 31
        %s219 = smul.addr %s218, 4
        %s220 = scalar_lea.vmem %s0, %s219
        %p221 = pneg %p47
        %p222 = pneg %p44
        %s223 = sand.u32 %s60, 1
        %s224 = sand.u32 %s60, 1
        %s225 = smul.addr %s224, 64
        %s226 = scalar_lea.vmem [#allocation4], %s225
        %p227 = pneg %p73
        %p228 = pneg %p70
        %s229 = smul.u32 4, %s19
        %p230 = scmp.lt.s32.totalorder %s229, 7
        %s231 = scalar_select %p230, %s229, 7
        %s232 = scalar_lea.vmem %s2, %s231
        %p233 = pneg %p99
        %p234 = pneg %p96
        %p235 = pneg %p125
        %p236 = pneg %p122
        %s237 = smul.u32 32, %s18
        %p238 = scmp.lt.s32.totalorder %s237, 31
        %s239 = scalar_select %p238, %s237, 31
        %s240 = smul.addr %s239, 8
        %s241 = scalar_lea.vmem %s3, %s240
        %s242 = smul.u32 32, %s18
        %p243 = scmp.lt.s32.totalorder %s242, 31
        %s244 = scalar_select %p243, %s242, 31
        %s245 = smul.addr %s244, 4
        %s246 = scalar_lea.vmem %s0, %s245
        %s247 = smul.u32 32, %s18
        %s248 = smul.u32 4, %s19
        %s249 = smul.u32 4, %s19
        %p250 = scmp.lt.s32.totalorder %s249, 7
        %s251 = scalar_select %p250, %s249, 7
        %s252 = scalar_lea.vmem %s2, %s251
        %s253 = smul.u32 4, %s19
        %s254 = smul.u32 32, %s18
        %p255 = scmp.lt.s32.totalorder %s254, 31
        %s256 = scalar_select %p255, %s254, 31
        %s257 = smul.addr %s256, 8
        %s258 = scalar_lea.vmem %s3, %s257
        %s259 = smul.u32 32, %s18
        %p261 = scmp.eq.s32.totalorder %s19, 0
        // Predicated region
        $region56: #{tpu_custom_call.1} parent=50 // pred_check
          %p262 = pneg %p261
        $region57: #{tpu_custom_call.1} parent=50 // pred_check_branch
          %264 = sbr.rel (%p262) target = $region59
        $region58: #{tpu_custom_call.1} parent=50 // pred_region
          %vm265 = vcmask 7168
          %266 = vst.msk [vmem:[#allocation2] sm:$0xff] %vm265, -inf
          %267 = vst.msk [vmem:[#allocation2 + $0x8] sm:$0xff] %vm265, -inf
          %268 = vst.msk [vmem:[#allocation2 + $0x10] sm:$0xff] %vm265, -inf
          %269 = vst.msk [vmem:[#allocation2 + $0x18] sm:$0xff] %vm265, -inf
          %270 = vst.msk [vmem:[#allocation2 + $0x20] sm:$0xff] %vm265, -inf
          %271 = vst.msk [vmem:[#allocation2 + $0x28] sm:$0xff] %vm265, -inf
          %272 = vst.msk [vmem:[#allocation2 + $0x30] sm:$0xff] %vm265, -inf
          %273 = vst.msk [vmem:[#allocation2 + $0x38] sm:$0xff] %vm265, -inf
          %274 = vst.msk [vmem:[#allocation2 + $0x40] sm:$0xff] %vm265, -inf
          %275 = vst.msk [vmem:[#allocation2 + $0x48] sm:$0xff] %vm265, -inf
          %276 = vst.msk [vmem:[#allocation2 + $0x50] sm:$0xff] %vm265, -inf
          %277 = vst.msk [vmem:[#allocation2 + $0x58] sm:$0xff] %vm265, -inf
          %278 = vst.msk [vmem:[#allocation2 + $0x60] sm:$0xff] %vm265, -inf
          %279 = vst.msk [vmem:[#allocation2 + $0x68] sm:$0xff] %vm265, -inf
          %280 = vst.msk [vmem:[#allocation2 + $0x70] sm:$0xff] %vm265, -inf
          %281 = vst.msk [vmem:[#allocation2 + $0x78] sm:$0xff] %vm265, -inf
          %282 = vst.msk [vmem:[#allocation2 + $0x80] sm:$0xff] %vm265, -inf
          %283 = vst.msk [vmem:[#allocation2 + $0x88] sm:$0xff] %vm265, -inf
          %284 = vst.msk [vmem:[#allocation2 + $0x90] sm:$0xff] %vm265, -inf
          %285 = vst.msk [vmem:[#allocation2 + $0x98] sm:$0xff] %vm265, -inf
          %286 = vst.msk [vmem:[#allocation2 + $0xa0] sm:$0xff] %vm265, -inf
          %287 = vst.msk [vmem:[#allocation2 + $0xa8] sm:$0xff] %vm265, -inf
          %288 = vst.msk [vmem:[#allocation2 + $0xb0] sm:$0xff] %vm265, -inf
          %289 = vst.msk [vmem:[#allocation2 + $0xb8] sm:$0xff] %vm265, -inf
          %290 = vst.msk [vmem:[#allocation2 + $0xc0] sm:$0xff] %vm265, -inf
          %291 = vst.msk [vmem:[#allocation2 + $0xc8] sm:$0xff] %vm265, -inf
          %292 = vst.msk [vmem:[#allocation2 + $0xd0] sm:$0xff] %vm265, -inf
          %293 = vst.msk [vmem:[#allocation2 + $0xd8] sm:$0xff] %vm265, -inf
          %294 = vst.msk [vmem:[#allocation2 + $0xe0] sm:$0xff] %vm265, -inf
          %295 = vst.msk [vmem:[#allocation2 + $0xe8] sm:$0xff] %vm265, -inf
          %296 = vst.msk [vmem:[#allocation2 + $0xf0] sm:$0xff] %vm265, -inf
          %297 = vst.msk [vmem:[#allocation2 + $0xf8] sm:$0xff] %vm265, -inf
          %298 = vst.msk [vmem:[#allocation3] sm:$0xff] %vm265, 0.0
          %299 = vst.msk [vmem:[#allocation3 + $0x8] sm:$0xff] %vm265, 0.0
          %300 = vst.msk [vmem:[#allocation3 + $0x10] sm:$0xff] %vm265, 0.0
          %301 = vst.msk [vmem:[#allocation3 + $0x18] sm:$0xff] %vm265, 0.0
          %302 = vst.msk [vmem:[#allocation3 + $0x20] sm:$0xff] %vm265, 0.0
          %303 = vst.msk [vmem:[#allocation3 + $0x28] sm:$0xff] %vm265, 0.0
          %304 = vst.msk [vmem:[#allocation3 + $0x30] sm:$0xff] %vm265, 0.0
          %305 = vst.msk [vmem:[#allocation3 + $0x38] sm:$0xff] %vm265, 0.0
          %306 = vst.msk [vmem:[#allocation3 + $0x40] sm:$0xff] %vm265, 0.0
          %307 = vst.msk [vmem:[#allocation3 + $0x48] sm:$0xff] %vm265, 0.0
          %308 = vst.msk [vmem:[#allocation3 + $0x50] sm:$0xff] %vm265, 0.0
          %309 = vst.msk [vmem:[#allocation3 + $0x58] sm:$0xff] %vm265, 0.0
          %310 = vst.msk [vmem:[#allocation3 + $0x60] sm:$0xff] %vm265, 0.0
          %311 = vst.msk [vmem:[#allocation3 + $0x68] sm:$0xff] %vm265, 0.0
          %312 = vst.msk [vmem:[#allocation3 + $0x70] sm:$0xff] %vm265, 0.0
          %313 = vst.msk [vmem:[#allocation3 + $0x78] sm:$0xff] %vm265, 0.0
          %314 = vst.msk [vmem:[#allocation3 + $0x80] sm:$0xff] %vm265, 0.0
          %315 = vst.msk [vmem:[#allocation3 + $0x88] sm:$0xff] %vm265, 0.0
          %316 = vst.msk [vmem:[#allocation3 + $0x90] sm:$0xff] %vm265, 0.0
          %317 = vst.msk [vmem:[#allocation3 + $0x98] sm:$0xff] %vm265, 0.0
          %318 = vst.msk [vmem:[#allocation3 + $0xa0] sm:$0xff] %vm265, 0.0
          %319 = vst.msk [vmem:[#allocation3 + $0xa8] sm:$0xff] %vm265, 0.0
          %320 = vst.msk [vmem:[#allocation3 + $0xb0] sm:$0xff] %vm265, 0.0
          %321 = vst.msk [vmem:[#allocation3 + $0xb8] sm:$0xff] %vm265, 0.0
          %322 = vst.msk [vmem:[#allocation3 + $0xc0] sm:$0xff] %vm265, 0.0
          %323 = vst.msk [vmem:[#allocation3 + $0xc8] sm:$0xff] %vm265, 0.0
          %324 = vst.msk [vmem:[#allocation3 + $0xd0] sm:$0xff] %vm265, 0.0
          %325 = vst.msk [vmem:[#allocation3 + $0xd8] sm:$0xff] %vm265, 0.0
          %326 = vst.msk [vmem:[#allocation3 + $0xe0] sm:$0xff] %vm265, 0.0
          %327 = vst.msk [vmem:[#allocation3 + $0xe8] sm:$0xff] %vm265, 0.0
          %328 = vst.msk [vmem:[#allocation3 + $0xf0] sm:$0xff] %vm265, 0.0
          %329 = vst.msk [vmem:[#allocation3 + $0xf8] sm:$0xff] %vm265, 0.0
        $region59: #{tpu_custom_call.1} parent=50 // pred_fallthru
          _
        %v330 = vld [vmem:[%s246] sm:$0xf]
        %v331 = vld [vmem:[%s246 + $0x4] sm:$0xf]
        %v332 = vld [vmem:[%s246 + $0x8] sm:$0xf]
        %v333 = vld [vmem:[%s246 + $0xc] sm:$0xf]
        %v334 = vld [vmem:[%s246 + $0x10] sm:$0xf]
        %v335 = vld [vmem:[%s246 + $0x14] sm:$0xf]
        %v336 = vld [vmem:[%s246 + $0x18] sm:$0xf]
        %v337 = vld [vmem:[%s246 + $0x1c] sm:$0xf]
        %v338 = vld [vmem:[%s246 + $0x20] sm:$0xf]
        %v339 = vld [vmem:[%s246 + $0x24] sm:$0xf]
        %v340 = vld [vmem:[%s246 + $0x28] sm:$0xf]
        %v341 = vld [vmem:[%s246 + $0x2c] sm:$0xf]
        %v342 = vld [vmem:[%s246 + $0x30] sm:$0xf]
        %v343 = vld [vmem:[%s246 + $0x34] sm:$0xf]
        %v344 = vld [vmem:[%s246 + $0x38] sm:$0xf]
        %v345 = vld [vmem:[%s246 + $0x3c] sm:$0xf]
        %v346 = vld [vmem:[%s246 + $0x40] sm:$0xf]
        %v347 = vld [vmem:[%s246 + $0x44] sm:$0xf]
        %v348 = vld [vmem:[%s246 + $0x48] sm:$0xf]
        %v349 = vld [vmem:[%s246 + $0x4c] sm:$0xf]
        %v350 = vld [vmem:[%s246 + $0x50] sm:$0xf]
        %v351 = vld [vmem:[%s246 + $0x54] sm:$0xf]
        %v352 = vld [vmem:[%s246 + $0x58] sm:$0xf]
        %v353 = vld [vmem:[%s246 + $0x5c] sm:$0xf]
        %v354 = vld [vmem:[%s246 + $0x60] sm:$0xf]
        %v355 = vld [vmem:[%s246 + $0x64] sm:$0xf]
        %v356 = vld [vmem:[%s246 + $0x68] sm:$0xf]
        %v357 = vld [vmem:[%s246 + $0x6c] sm:$0xf]
        %v358 = vld [vmem:[%s246 + $0x70] sm:$0xf]
        %v359 = vld [vmem:[%s246 + $0x74] sm:$0xf]
        %v360 = vld [vmem:[%s246 + $0x78] sm:$0xf]
        %v361 = vld [vmem:[%s246 + $0x7c] sm:$0xf]
        %v362 = vld [vmem:[%s212] sm:$0xff]
        %v363 = vld [vmem:[%s212 + $0x8] sm:$0xff]
        %v364 = vld [vmem:[%s212 + $0x10] sm:$0xff]
        %v365 = vld [vmem:[%s212 + $0x18] sm:$0xff]
        %v366 = vld [vmem:[%s212 + $0x20] sm:$0xff]
        %v367 = vld [vmem:[%s212 + $0x28] sm:$0xff]
        %v368 = vld [vmem:[%s212 + $0x30] sm:$0xff]
        %v369 = vld [vmem:[%s212 + $0x38] sm:$0xff]
        %v370 = vld [vmem:[%s252] sm:$0xf]
        %v372 = vlaneseq
        %v373 = vshrl.u32 %v372, 7
        %v374 = vsub.s32 0, %v373
        %v375 = vrot.slane %v370, %v374
        %v376 = vlaneseq
        %v377 = vshrl.u32 %v376, 7
        %v378 = vsub.s32 1, %v377
        %v379 = vrot.slane %v370, %v378
        %v380 = vlaneseq
        %v381 = vshrl.u32 %v380, 7
        %v382 = vsub.s32 2, %v381
        %v383 = vrot.slane %v370, %v382
        %v384 = vlaneseq
        %v385 = vshrl.u32 %v384, 7
        %v386 = vsub.s32 3, %v385
        %v387 = vrot.slane %v370, %v386
        %v424 = vunpack.c.l.b16 %v330
        %v425 = vunpack.c.l.b16 %v331
        %v426 = vunpack.c.l.b16 %v332
        %v427 = vunpack.c.l.b16 %v333
        %v428 = vunpack.c.l.b16 %v334
        %v429 = vunpack.c.l.b16 %v335
        %v430 = vunpack.c.l.b16 %v336
        %v431 = vunpack.c.l.b16 %v337
        %v432 = vunpack.c.l.b16 %v338
        %v433 = vunpack.c.l.b16 %v339
        %v434 = vunpack.c.l.b16 %v340
        %v435 = vunpack.c.l.b16 %v341
        %v436 = vunpack.c.l.b16 %v342
        %v437 = vunpack.c.l.b16 %v343
        %v438 = vunpack.c.l.b16 %v344
        %v439 = vunpack.c.l.b16 %v345
        %v440 = vunpack.c.l.b16 %v346
        %v441 = vunpack.c.l.b16 %v347
        %v442 = vunpack.c.l.b16 %v348
        %v443 = vunpack.c.l.b16 %v349
        %v444 = vunpack.c.l.b16 %v350
        %v445 = vunpack.c.l.b16 %v351
        %v446 = vunpack.c.l.b16 %v352
        %v447 = vunpack.c.l.b16 %v353
        %v448 = vunpack.c.l.b16 %v354
        %v449 = vunpack.c.l.b16 %v355
        %v450 = vunpack.c.l.b16 %v356
        %v451 = vunpack.c.l.b16 %v357
        %v452 = vunpack.c.l.b16 %v358
        %v453 = vunpack.c.l.b16 %v359
        %v454 = vunpack.c.l.b16 %v360
        %v455 = vunpack.c.l.b16 %v361
        %v456 = vpack.c.b16 %v425, %v424
        %v457 = vpack.c.b16 %v427, %v426
        %v458 = vpack.c.b16 %v429, %v428
        %v459 = vpack.c.b16 %v431, %v430
        %v460 = vpack.c.b16 %v433, %v432
        %v461 = vpack.c.b16 %v435, %v434
        %v462 = vpack.c.b16 %v437, %v436
        %v463 = vpack.c.b16 %v439, %v438
        %v464 = vpack.c.b16 %v441, %v440
        %v465 = vpack.c.b16 %v443, %v442
        %v466 = vpack.c.b16 %v445, %v444
        %v467 = vpack.c.b16 %v447, %v446
        %v468 = vpack.c.b16 %v449, %v448
        %v469 = vpack.c.b16 %v451, %v450
        %v470 = vpack.c.b16 %v453, %v452
        %v471 = vpack.c.b16 %v455, %v454
        %v480 = vunpack.c.l.b16 %v362
        %v481 = vunpack.c.h.b16 %v362
        %v482 = vunpack.c.l.b16 %v363
        %v483 = vunpack.c.h.b16 %v363
        %v484 = vunpack.c.l.b16 %v364
        %v485 = vunpack.c.h.b16 %v364
        %v486 = vunpack.c.l.b16 %v365
        %v487 = vunpack.c.h.b16 %v365
        %v488 = vunpack.c.l.b16 %v366
        %v489 = vunpack.c.h.b16 %v366
        %v490 = vunpack.c.l.b16 %v367
        %v491 = vunpack.c.h.b16 %v367
        %v492 = vunpack.c.l.b16 %v368
        %v493 = vunpack.c.h.b16 %v368
        %v494 = vunpack.c.l.b16 %v369
        %v495 = vunpack.c.h.b16 %v369
        %v496 = vpack.c.b16 %v484, %v480
        %v497 = vpack.c.b16 %v485, %v481
        %v498 = vpack.c.b16 %v486, %v482
        %v499 = vpack.c.b16 %v487, %v483
        %v500 = vpack.c.b16 %v492, %v488
        %v501 = vpack.c.b16 %v493, %v489
        %v502 = vpack.c.b16 %v494, %v490
        %v503 = vpack.c.b16 %v495, %v491
        %vm512 = vcmask 261120
        %v514 = vsel %vm512, %v456, 0
        %v517 = vsel %vm512, %v457, 0
        %v520 = vsel %vm512, %v458, 0
        %v523 = vsel %vm512, %v459, 0
        %v526 = vsel %vm512, %v460, 0
        %v529 = vsel %vm512, %v461, 0
        %v532 = vsel %vm512, %v462, 0
        %v535 = vsel %vm512, %v463, 0
        %v538 = vsel %vm512, %v464, 0
        %v541 = vsel %vm512, %v465, 0
        %v544 = vsel %vm512, %v466, 0
        %v547 = vsel %vm512, %v467, 0
        %v550 = vsel %vm512, %v468, 0
        %v553 = vsel %vm512, %v469, 0
        %v556 = vsel %vm512, %v470, 0
        %v559 = vsel %vm512, %v471, 0
        %561 = vmatprep.subr.bf16.mxu0 %v497
        %562 = vmatpush1.bf16.msra.mxu0 %v496
        %563 = vmatprep.subr.bf16.mxu0 %v501
        %564 = vmatpush1.bf16.msra.mxu0 %v500
        %565 = vmatprep.subr.bf16.mxu0 0
        %566 = vmatpush1.bf16.msra.mxu0 0
        %567 = vmatprep.subr.bf16.mxu0 0
        %568 = vmatpush1.bf16.msra.mxu0 0
        %569 = vmatprep.subr.bf16.mxu0 0
        %570 = vmatpush1.bf16.msra.mxu0 0
        %571 = vmatprep.subr.bf16.mxu0 0
        %572 = vmatpush1.bf16.msra.mxu0 0
        %573 = vmatprep.subr.bf16.mxu0 0
        %574 = vmatpush1.bf16.msra.mxu0 0
        %575 = vmatprep.subr.bf16.mxu0 0
        %576 = vmatpush1.bf16.msra.mxu0 0
        %577 = vmatprep.subr.bf16.mxu0 0
        %578 = vmatpush1.bf16.msra.mxu0 0
        %579 = vmatprep.subr.bf16.mxu0 0
        %580 = vmatpush1.bf16.msra.mxu0 0
        %581 = vmatprep.subr.bf16.mxu0 0
        %582 = vmatpush1.bf16.msra.mxu0 0
        %583 = vmatprep.subr.bf16.mxu0 0
        %584 = vmatpush1.bf16.msra.mxu0 0
        %585 = vmatprep.subr.bf16.mxu0 0
        %586 = vmatpush1.bf16.msra.mxu0 0
        %587 = vmatprep.subr.bf16.mxu0 0
        %588 = vmatpush1.bf16.msra.mxu0 0
        %589 = vmatprep.subr.bf16.mxu0 0
        %590 = vmatpush1.bf16.msra.mxu0 0
        %591 = vmatprep.subr.bf16.mxu0 0
        %592 = vmatpush1.bf16.msra.mxu0 0
        %593 = vmatprep.mubr.bf16.mxu0 0
        %594 = vmatmul.mubr.bf16.gmra.mrb[0].mxu0 %v514
        %v595 = vpop.f32.mrb[0].mxu0
        %v596 = vadd.f32 %v375, %v595
        %v597 = vpop.f32.mrb[0].mxu0
        %v598 = vadd.f32 %v379, %v597
        %v599 = vpop.f32.mrb[0].mxu0
        %v600 = vadd.f32 %v375, %v599
        %v601 = vpop.f32.mrb[0].mxu0
        %v602 = vadd.f32 %v379, %v601
        %603 = vmatprep.mubr.bf16.mxu0 0
        %604 = vmatmul.mubr.bf16.gmra.mrb[0].mxu0 %v517
        %v605 = vpop.f32.mrb[0].mxu0
        %v606 = vadd.f32 %v375, %v605
        %v607 = vpop.f32.mrb[0].mxu0
        %v608 = vadd.f32 %v379, %v607
        %v609 = vpop.f32.mrb[0].mxu0
        %v610 = vadd.f32 %v375, %v609
        %v611 = vpop.f32.mrb[0].mxu0
        %v612 = vadd.f32 %v379, %v611
        %613 = vmatprep.mubr.bf16.mxu0 0
        %614 = vmatmul.mubr.bf16.gmra.mrb[0].mxu0 %v520
        %v615 = vpop.f32.mrb[0].mxu0
        %v616 = vadd.f32 %v375, %v615
        %v617 = vpop.f32.mrb[0].mxu0
        %v618 = vadd.f32 %v379, %v617
        %v619 = vpop.f32.mrb[0].mxu0
        %v620 = vadd.f32 %v375, %v619
        %v621 = vpop.f32.mrb[0].mxu0
        %v622 = vadd.f32 %v379, %v621
        %623 = vmatprep.mubr.bf16.mxu0 0
        %624 = vmatmul.mubr.bf16.gmra.mrb[0].mxu0 %v523
        %v625 = vpop.f32.mrb[0].mxu0
        %v626 = vadd.f32 %v375, %v625
        %v627 = vpop.f32.mrb[0].mxu0
        %v628 = vadd.f32 %v379, %v627
        %v629 = vpop.f32.mrb[0].mxu0
        %v630 = vadd.f32 %v375, %v629
        %v631 = vpop.f32.mrb[0].mxu0
        %v632 = vadd.f32 %v379, %v631
        %633 = vmatprep.mubr.bf16.mxu0 0
        %634 = vmatmul.mubr.bf16.gmra.mrb[0].mxu0 %v526
        %v635 = vpop.f32.mrb[0].mxu0
        %v636 = vadd.f32 %v375, %v635
        %v637 = vpop.f32.mrb[0].mxu0
        %v638 = vadd.f32 %v379, %v637
        %v639 = vpop.f32.mrb[0].mxu0
        %v640 = vadd.f32 %v375, %v639
        %v641 = vpop.f32.mrb[0].mxu0
        %v642 = vadd.f32 %v379, %v641
        %643 = vmatprep.mubr.bf16.mxu0 0
        %644 = vmatmul.mubr.bf16.gmra.mrb[0].mxu0 %v529
        %v645 = vpop.f32.mrb[0].mxu0
        %v646 = vadd.f32 %v375, %v645
        %v647 = vpop.f32.mrb[0].mxu0
        %v648 = vadd.f32 %v379, %v647
        %v649 = vpop.f32.mrb[0].mxu0
        %v650 = vadd.f32 %v375, %v649
        %v651 = vpop.f32.mrb[0].mxu0
        %v652 = vadd.f32 %v379, %v651
        %653 = vmatprep.mubr.bf16.mxu0 0
        %654 = vmatmul.mubr.bf16.gmra.mrb[0].mxu0 %v532
        %v655 = vpop.f32.mrb[0].mxu0
        %v656 = vadd.f32 %v375, %v655
        %v657 = vpop.f32.mrb[0].mxu0
        %v658 = vadd.f32 %v379, %v657
        %v659 = vpop.f32.mrb[0].mxu0
        %v660 = vadd.f32 %v375, %v659
        %v661 = vpop.f32.mrb[0].mxu0
        %v662 = vadd.f32 %v379, %v661
        %663 = vmatprep.mubr.bf16.mxu0 0
        %664 = vmatmul.mubr.bf16.gmra.mrb[0].mxu0 %v535
        %v665 = vpop.f32.mrb[0].mxu0
        %v666 = vadd.f32 %v375, %v665
        %v667 = vpop.f32.mrb[0].mxu0
        %v668 = vadd.f32 %v379, %v667
        %v669 = vpop.f32.mrb[0].mxu0
        %v670 = vadd.f32 %v375, %v669
        %v671 = vpop.f32.mrb[0].mxu0
        %v672 = vadd.f32 %v379, %v671
        %673 = vmatprep.mubr.bf16.mxu0 0
        %674 = vmatmul.mubr.bf16.gmra.mrb[0].mxu0 %v538
        %v675 = vpop.f32.mrb[0].mxu0
        %v676 = vadd.f32 %v375, %v675
        %v677 = vpop.f32.mrb[0].mxu0
        %v678 = vadd.f32 %v379, %v677
        %v679 = vpop.f32.mrb[0].mxu0
        %v680 = vadd.f32 %v375, %v679
        %v681 = vpop.f32.mrb[0].mxu0
        %v682 = vadd.f32 %v379, %v681
        %683 = vmatprep.mubr.bf16.mxu0 0
        %684 = vmatmul.mubr.bf16.gmra.mrb[0].mxu0 %v541
        %v685 = vpop.f32.mrb[0].mxu0
        %v686 = vadd.f32 %v375, %v685
        %v687 = vpop.f32.mrb[0].mxu0
        %v688 = vadd.f32 %v379, %v687
        %v689 = vpop.f32.mrb[0].mxu0
        %v690 = vadd.f32 %v375, %v689
        %v691 = vpop.f32.mrb[0].mxu0
        %v692 = vadd.f32 %v379, %v691
        %693 = vmatprep.mubr.bf16.mxu0 0
        %694 = vmatmul.mubr.bf16.gmra.mrb[0].mxu0 %v544
        %v695 = vpop.f32.mrb[0].mxu0
        %v696 = vadd.f32 %v375, %v695
        %v697 = vpop.f32.mrb[0].mxu0
        %v698 = vadd.f32 %v379, %v697
        %v699 = vpop.f32.mrb[0].mxu0
        %v700 = vadd.f32 %v375, %v699
        %v701 = vpop.f32.mrb[0].mxu0
        %v702 = vadd.f32 %v379, %v701
        %703 = vmatprep.mubr.bf16.mxu0 0
        %704 = vmatmul.mubr.bf16.gmra.mrb[0].mxu0 %v547
        %v705 = vpop.f32.mrb[0].mxu0
        %v706 = vadd.f32 %v375, %v705
        %v707 = vpop.f32.mrb[0].mxu0
        %v708 = vadd.f32 %v379, %v707
        %v709 = vpop.f32.mrb[0].mxu0
        %v710 = vadd.f32 %v375, %v709
        %v711 = vpop.f32.mrb[0].mxu0
        %v712 = vadd.f32 %v379, %v711
        %713 = vmatprep.mubr.bf16.mxu0 0
        %714 = vmatmul.mubr.bf16.gmra.mrb[0].mxu0 %v550
        %v715 = vpop.f32.mrb[0].mxu0
        %v716 = vadd.f32 %v375, %v715
        %v717 = vpop.f32.mrb[0].mxu0
        %v718 = vadd.f32 %v379, %v717
        %v719 = vpop.f32.mrb[0].mxu0
        %v720 = vadd.f32 %v375, %v719
        %v721 = vpop.f32.mrb[0].mxu0
        %v722 = vadd.f32 %v379, %v721
        %723 = vmatprep.mubr.bf16.mxu0 0
        %724 = vmatmul.mubr.bf16.gmra.mrb[0].mxu0 %v553
        %v725 = vpop.f32.mrb[0].mxu0
        %v726 = vadd.f32 %v375, %v725
        %v727 = vpop.f32.mrb[0].mxu0
        %v728 = vadd.f32 %v379, %v727
        %v729 = vpop.f32.mrb[0].mxu0
        %v730 = vadd.f32 %v375, %v729
        %v731 = vpop.f32.mrb[0].mxu0
        %v732 = vadd.f32 %v379, %v731
        %733 = vmatprep.mubr.bf16.mxu0 0
        %734 = vmatmul.mubr.bf16.gmra.mrb[0].mxu0 %v556
        %v735 = vpop.f32.mrb[0].mxu0
        %v736 = vadd.f32 %v375, %v735
        %v737 = vpop.f32.mrb[0].mxu0
        %v738 = vadd.f32 %v379, %v737
        %v739 = vpop.f32.mrb[0].mxu0
        %v740 = vadd.f32 %v375, %v739
        %v741 = vpop.f32.mrb[0].mxu0
        %v742 = vadd.f32 %v379, %v741
        %743 = vmatprep.mubr.bf16.mxu0 0
        %744 = vmatmul.mubr.bf16.gmra.mrb[0].mxu0 %v559
        %v745 = vpop.f32.mrb[0].mxu0
        %v746 = vadd.f32 %v375, %v745
        %v747 = vpop.f32.mrb[0].mxu0
        %v748 = vadd.f32 %v379, %v747
        %v749 = vpop.f32.mrb[0].mxu0
        %v750 = vadd.f32 %v375, %v749
        %v751 = vpop.f32.mrb[0].mxu0
        %v752 = vadd.f32 %v379, %v751
        %753 = vdwg.mxu0
        %754 = vmatprep.subr.bf16.mxu0 %v499
        %755 = vmatpush1.bf16.msra.mxu0 %v498
        %756 = vmatprep.subr.bf16.mxu0 %v503
        %757 = vmatpush1.bf16.msra.mxu0 %v502
        %758 = vmatprep.subr.bf16.mxu0 0
        %759 = vmatpush1.bf16.msra.mxu0 0
        %760 = vmatprep.subr.bf16.mxu0 0
        %761 = vmatpush1.bf16.msra.mxu0 0
        %762 = vmatprep.subr.bf16.mxu0 0
        %763 = vmatpush1.bf16.msra.mxu0 0
        %764 = vmatprep.subr.bf16.mxu0 0
        %765 = vmatpush1.bf16.msra.mxu0 0
        %766 = vmatprep.subr.bf16.mxu0 0
        %767 = vmatpush1.bf16.msra.mxu0 0
        %768 = vmatprep.subr.bf16.mxu0 0
        %769 = vmatpush1.bf16.msra.mxu0 0
        %770 = vmatprep.subr.bf16.mxu0 0
        %771 = vmatpush1.bf16.msra.mxu0 0
        %772 = vmatprep.subr.bf16.mxu0 0
        %773 = vmatpush1.bf16.msra.mxu0 0
        %774 = vmatprep.subr.bf16.mxu0 0
        %775 = vmatpush1.bf16.msra.mxu0 0
        %776 = vmatprep.subr.bf16.mxu0 0
        %777 = vmatpush1.bf16.msra.mxu0 0
        %778 = vmatprep.subr.bf16.mxu0 0
        %779 = vmatpush1.bf16.msra.mxu0 0
        %780 = vmatprep.subr.bf16.mxu0 0
        %781 = vmatpush1.bf16.msra.mxu0 0
        %782 = vmatprep.subr.bf16.mxu0 0
        %783 = vmatpush1.bf16.msra.mxu0 0
        %784 = vmatprep.subr.bf16.mxu0 0
        %785 = vmatpush1.bf16.msra.mxu0 0
        %786 = vmatprep.mubr.bf16.mxu0 0
        %787 = vmatmul.mubr.bf16.gmra.mrb[0].mxu0 %v514
        %v788 = vpop.f32.mrb[0].mxu0
        %v789 = vadd.f32 %v383, %v788
        %v790 = vpop.f32.mrb[0].mxu0
        %v791 = vadd.f32 %v387, %v790
        %v792 = vpop.f32.mrb[0].mxu0
        %v793 = vadd.f32 %v383, %v792
        %v794 = vpop.f32.mrb[0].mxu0
        %v795 = vadd.f32 %v387, %v794
        %796 = vmatprep.mubr.bf16.mxu0 0
        %797 = vmatmul.mubr.bf16.gmra.mrb[0].mxu0 %v517
        %v798 = vpop.f32.mrb[0].mxu0
        %v799 = vadd.f32 %v383, %v798
        %v800 = vpop.f32.mrb[0].mxu0
        %v801 = vadd.f32 %v387, %v800
        %v802 = vpop.f32.mrb[0].mxu0
        %v803 = vadd.f32 %v383, %v802
        %v804 = vpop.f32.mrb[0].mxu0
        %v805 = vadd.f32 %v387, %v804
        %806 = vmatprep.mubr.bf16.mxu0 0
        %807 = vmatmul.mubr.bf16.gmra.mrb[0].mxu0 %v520
        %v808 = vpop.f32.mrb[0].mxu0
        %v809 = vadd.f32 %v383, %v808
        %v810 = vpop.f32.mrb[0].mxu0
        %v811 = vadd.f32 %v387, %v810
        %v812 = vpop.f32.mrb[0].mxu0
        %v813 = vadd.f32 %v383, %v812
        %v814 = vpop.f32.mrb[0].mxu0
        %v815 = vadd.f32 %v387, %v814
        %816 = vmatprep.mubr.bf16.mxu0 0
        %817 = vmatmul.mubr.bf16.gmra.mrb[0].mxu0 %v523
        %v818 = vpop.f32.mrb[0].mxu0
        %v819 = vadd.f32 %v383, %v818
        %v820 = vpop.f32.mrb[0].mxu0
        %v821 = vadd.f32 %v387, %v820
        %v822 = vpop.f32.mrb[0].mxu0
        %v823 = vadd.f32 %v383, %v822
        %v824 = vpop.f32.mrb[0].mxu0
        %v825 = vadd.f32 %v387, %v824
        %826 = vmatprep.mubr.bf16.mxu0 0
        %827 = vmatmul.mubr.bf16.gmra.mrb[0].mxu0 %v526
        %v828 = vpop.f32.mrb[0].mxu0
        %v829 = vadd.f32 %v383, %v828
        %v830 = vpop.f32.mrb[0].mxu0
        %v831 = vadd.f32 %v387, %v830
        %v832 = vpop.f32.mrb[0].mxu0
        %v833 = vadd.f32 %v383, %v832
        %v834 = vpop.f32.mrb[0].mxu0
        %v835 = vadd.f32 %v387, %v834
        %836 = vmatprep.mubr.bf16.mxu0 0
        %837 = vmatmul.mubr.bf16.gmra.mrb[0].mxu0 %v529
        %v838 = vpop.f32.mrb[0].mxu0
        %v839 = vadd.f32 %v383, %v838
        %v840 = vpop.f32.mrb[0].mxu0
        %v841 = vadd.f32 %v387, %v840
        %v842 = vpop.f32.mrb[0].mxu0
        %v843 = vadd.f32 %v383, %v842
        %v844 = vpop.f32.mrb[0].mxu0
        %v845 = vadd.f32 %v387, %v844
        %846 = vmatprep.mubr.bf16.mxu0 0
        %847 = vmatmul.mubr.bf16.gmra.mrb[0].mxu0 %v532
        %v848 = vpop.f32.mrb[0].mxu0
        %v849 = vadd.f32 %v383, %v848
        %v850 = vpop.f32.mrb[0].mxu0
        %v851 = vadd.f32 %v387, %v850
        %v852 = vpop.f32.mrb[0].mxu0
        %v853 = vadd.f32 %v383, %v852
        %v854 = vpop.f32.mrb[0].mxu0
        %v855 = vadd.f32 %v387, %v854
        %856 = vmatprep.mubr.bf16.mxu0 0
        %857 = vmatmul.mubr.bf16.gmra.mrb[0].mxu0 %v535
        %v858 = vpop.f32.mrb[0].mxu0
        %v859 = vadd.f32 %v383, %v858
        %v860 = vpop.f32.mrb[0].mxu0
        %v861 = vadd.f32 %v387, %v860
        %v862 = vpop.f32.mrb[0].mxu0
        %v863 = vadd.f32 %v383, %v862
        %v864 = vpop.f32.mrb[0].mxu0
        %v865 = vadd.f32 %v387, %v864
        %866 = vmatprep.mubr.bf16.mxu0 0
        %867 = vmatmul.mubr.bf16.gmra.mrb[0].mxu0 %v538
        %v868 = vpop.f32.mrb[0].mxu0
        %v869 = vadd.f32 %v383, %v868
        %v870 = vpop.f32.mrb[0].mxu0
        %v871 = vadd.f32 %v387, %v870
        %v872 = vpop.f32.mrb[0].mxu0
        %v873 = vadd.f32 %v383, %v872
        %v874 = vpop.f32.mrb[0].mxu0
        %v875 = vadd.f32 %v387, %v874
        %876 = vmatprep.mubr.bf16.mxu0 0
        %877 = vmatmul.mubr.bf16.gmra.mrb[0].mxu0 %v541
        %v878 = vpop.f32.mrb[0].mxu0
        %v879 = vadd.f32 %v383, %v878
        %v880 = vpop.f32.mrb[0].mxu0
        %v881 = vadd.f32 %v387, %v880
        %v882 = vpop.f32.mrb[0].mxu0
        %v883 = vadd.f32 %v383, %v882
        %v884 = vpop.f32.mrb[0].mxu0
        %v885 = vadd.f32 %v387, %v884
        %886 = vmatprep.mubr.bf16.mxu0 0
        %887 = vmatmul.mubr.bf16.gmra.mrb[0].mxu0 %v544
        %v888 = vpop.f32.mrb[0].mxu0
        %v889 = vadd.f32 %v383, %v888
        %v890 = vpop.f32.mrb[0].mxu0
        %v891 = vadd.f32 %v387, %v890
        %v892 = vpop.f32.mrb[0].mxu0
        %v893 = vadd.f32 %v383, %v892
        %v894 = vpop.f32.mrb[0].mxu0
        %v895 = vadd.f32 %v387, %v894
        %896 = vmatprep.mubr.bf16.mxu0 0
        %897 = vmatmul.mubr.bf16.gmra.mrb[0].mxu0 %v547
        %v898 = vpop.f32.mrb[0].mxu0
        %v899 = vadd.f32 %v383, %v898
        %v900 = vpop.f32.mrb[0].mxu0
        %v901 = vadd.f32 %v387, %v900
        %v902 = vpop.f32.mrb[0].mxu0
        %v903 = vadd.f32 %v383, %v902
        %v904 = vpop.f32.mrb[0].mxu0
        %v905 = vadd.f32 %v387, %v904
        %906 = vmatprep.mubr.bf16.mxu0 0
        %907 = vmatmul.mubr.bf16.gmra.mrb[0].mxu0 %v550
        %v908 = vpop.f32.mrb[0].mxu0
        %v909 = vadd.f32 %v383, %v908
        %v910 = vpop.f32.mrb[0].mxu0
        %v911 = vadd.f32 %v387, %v910
        %v912 = vpop.f32.mrb[0].mxu0
        %v913 = vadd.f32 %v383, %v912
        %v914 = vpop.f32.mrb[0].mxu0
        %v915 = vadd.f32 %v387, %v914
        %916 = vmatprep.mubr.bf16.mxu0 0
        %917 = vmatmul.mubr.bf16.gmra.mrb[0].mxu0 %v553
        %v918 = vpop.f32.mrb[0].mxu0
        %v919 = vadd.f32 %v383, %v918
        %v920 = vpop.f32.mrb[0].mxu0
        %v921 = vadd.f32 %v387, %v920
        %v922 = vpop.f32.mrb[0].mxu0
        %v923 = vadd.f32 %v383, %v922
        %v924 = vpop.f32.mrb[0].mxu0
        %v925 = vadd.f32 %v387, %v924
        %926 = vmatprep.mubr.bf16.mxu0 0
        %927 = vmatmul.mubr.bf16.gmra.mrb[0].mxu0 %v556
        %v928 = vpop.f32.mrb[0].mxu0
        %v929 = vadd.f32 %v383, %v928
        %v930 = vpop.f32.mrb[0].mxu0
        %v931 = vadd.f32 %v387, %v930
        %v932 = vpop.f32.mrb[0].mxu0
        %v933 = vadd.f32 %v383, %v932
        %v934 = vpop.f32.mrb[0].mxu0
        %v935 = vadd.f32 %v387, %v934
        %936 = vmatprep.mubr.bf16.mxu0 0
        %937 = vmatmul.mubr.bf16.gmra.mrb[0].mxu0 %v559
        %v938 = vpop.f32.mrb[0].mxu0
        %v939 = vadd.f32 %v383, %v938
        %v940 = vpop.f32.mrb[0].mxu0
        %v941 = vadd.f32 %v387, %v940
        %v942 = vpop.f32.mrb[0].mxu0
        %v943 = vadd.f32 %v383, %v942
        %v944 = vpop.f32.mrb[0].mxu0
        %v945 = vadd.f32 %v387, %v944
        %946 = vdwg.mxu0
        %v947 = vld [vmem:[#allocation2] sm:$0xff]
        %v948 = vld [vmem:[#allocation2 + $0x8] sm:$0xff]
        %v949 = vld [vmem:[#allocation2 + $0x10] sm:$0xff]
        %v950 = vld [vmem:[#allocation2 + $0x18] sm:$0xff]
        %v951 = vld [vmem:[#allocation2 + $0x20] sm:$0xff]
        %v952 = vld [vmem:[#allocation2 + $0x28] sm:$0xff]
        %v953 = vld [vmem:[#allocation2 + $0x30] sm:$0xff]
        %v954 = vld [vmem:[#allocation2 + $0x38] sm:$0xff]
        %v955 = vld [vmem:[#allocation2 + $0x40] sm:$0xff]
        %v956 = vld [vmem:[#allocation2 + $0x48] sm:$0xff]
        %v957 = vld [vmem:[#allocation2 + $0x50] sm:$0xff]
        %v958 = vld [vmem:[#allocation2 + $0x58] sm:$0xff]
        %v959 = vld [vmem:[#allocation2 + $0x60] sm:$0xff]
        %v960 = vld [vmem:[#allocation2 + $0x68] sm:$0xff]
        %v961 = vld [vmem:[#allocation2 + $0x70] sm:$0xff]
        %v962 = vld [vmem:[#allocation2 + $0x78] sm:$0xff]
        %v963 = vld [vmem:[#allocation2 + $0x80] sm:$0xff]
        %v964 = vld [vmem:[#allocation2 + $0x88] sm:$0xff]
        %v965 = vld [vmem:[#allocation2 + $0x90] sm:$0xff]
        %v966 = vld [vmem:[#allocation2 + $0x98] sm:$0xff]
        %v967 = vld [vmem:[#allocation2 + $0xa0] sm:$0xff]
        %v968 = vld [vmem:[#allocation2 + $0xa8] sm:$0xff]
        %v969 = vld [vmem:[#allocation2 + $0xb0] sm:$0xff]
        %v970 = vld [vmem:[#allocation2 + $0xb8] sm:$0xff]
        %v971 = vld [vmem:[#allocation2 + $0xc0] sm:$0xff]
        %v972 = vld [vmem:[#allocation2 + $0xc8] sm:$0xff]
        %v973 = vld [vmem:[#allocation2 + $0xd0] sm:$0xff]
        %v974 = vld [vmem:[#allocation2 + $0xd8] sm:$0xff]
        %v975 = vld [vmem:[#allocation2 + $0xe0] sm:$0xff]
        %v976 = vld [vmem:[#allocation2 + $0xe8] sm:$0xff]
        %v977 = vld [vmem:[#allocation2 + $0xf0] sm:$0xff]
        %v978 = vld [vmem:[#allocation2 + $0xf8] sm:$0xff]
        %v979 = vmax.f32 %v596, %v598
        %v980 = vmax.f32 %v979, %v789
        %v981 = vmax.f32 %v980, %v791
        %982 = vmax.xlane.f32.xlu0 %v981
        %v983 = vpop.xlane.xlu0 %982
        %v984 = vmax.f32 %v600, %v602
        %v985 = vmax.f32 %v984, %v793
        %v986 = vmax.f32 %v985, %v795
        %987 = vmax.xlane.f32.xlu0 %v986
        %v988 = vpop.xlane.xlu0 %987
        %v989 = vmax.f32 %v606, %v608
        %v990 = vmax.f32 %v989, %v799
        %v991 = vmax.f32 %v990, %v801
        %992 = vmax.xlane.f32.xlu0 %v991
        %v993 = vpop.xlane.xlu0 %992
        %v994 = vmax.f32 %v610, %v612
        %v995 = vmax.f32 %v994, %v803
        %v996 = vmax.f32 %v995, %v805
        %997 = vmax.xlane.f32.xlu0 %v996
        %v998 = vpop.xlane.xlu0 %997
        %v999 = vmax.f32 %v616, %v618
        %v1000 = vmax.f32 %v999, %v809
        %v1001 = vmax.f32 %v1000, %v811
        %1002 = vmax.xlane.f32.xlu0 %v1001
        %v1003 = vpop.xlane.xlu0 %1002
        %v1004 = vmax.f32 %v620, %v622
        %v1005 = vmax.f32 %v1004, %v813
        %v1006 = vmax.f32 %v1005, %v815
        %1007 = vmax.xlane.f32.xlu0 %v1006
        %v1008 = vpop.xlane.xlu0 %1007
        %v1009 = vmax.f32 %v626, %v628
        %v1010 = vmax.f32 %v1009, %v819
        %v1011 = vmax.f32 %v1010, %v821
        %1012 = vmax.xlane.f32.xlu0 %v1011
        %v1013 = vpop.xlane.xlu0 %1012
        %v1014 = vmax.f32 %v630, %v632
        %v1015 = vmax.f32 %v1014, %v823
        %v1016 = vmax.f32 %v1015, %v825
        %1017 = vmax.xlane.f32.xlu0 %v1016
        %v1018 = vpop.xlane.xlu0 %1017
        %v1019 = vmax.f32 %v636, %v638
        %v1020 = vmax.f32 %v1019, %v829
        %v1021 = vmax.f32 %v1020, %v831
        %1022 = vmax.xlane.f32.xlu0 %v1021
        %v1023 = vpop.xlane.xlu0 %1022
        %v1024 = vmax.f32 %v640, %v642
        %v1025 = vmax.f32 %v1024, %v833
        %v1026 = vmax.f32 %v1025, %v835
        %1027 = vmax.xlane.f32.xlu0 %v1026
        %v1028 = vpop.xlane.xlu0 %1027
        %v1029 = vmax.f32 %v646, %v648
        %v1030 = vmax.f32 %v1029, %v839
        %v1031 = vmax.f32 %v1030, %v841
        %1032 = vmax.xlane.f32.xlu0 %v1031
        %v1033 = vpop.xlane.xlu0 %1032
        %v1034 = vmax.f32 %v650, %v652
        %v1035 = vmax.f32 %v1034, %v843
        %v1036 = vmax.f32 %v1035, %v845
        %1037 = vmax.xlane.f32.xlu0 %v1036
        %v1038 = vpop.xlane.xlu0 %1037
        %v1039 = vmax.f32 %v656, %v658
        %v1040 = vmax.f32 %v1039, %v849
        %v1041 = vmax.f32 %v1040, %v851
        %1042 = vmax.xlane.f32.xlu0 %v1041
        %v1043 = vpop.xlane.xlu0 %1042
        %v1044 = vmax.f32 %v660, %v662
        %v1045 = vmax.f32 %v1044, %v853
        %v1046 = vmax.f32 %v1045, %v855
        %1047 = vmax.xlane.f32.xlu0 %v1046
        %v1048 = vpop.xlane.xlu0 %1047
        %v1049 = vmax.f32 %v666, %v668
        %v1050 = vmax.f32 %v1049, %v859
        %v1051 = vmax.f32 %v1050, %v861
        %1052 = vmax.xlane.f32.xlu0 %v1051
        %v1053 = vpop.xlane.xlu0 %1052
        %v1054 = vmax.f32 %v670, %v672
        %v1055 = vmax.f32 %v1054, %v863
        %v1056 = vmax.f32 %v1055, %v865
        %1057 = vmax.xlane.f32.xlu0 %v1056
        %v1058 = vpop.xlane.xlu0 %1057
        %v1059 = vmax.f32 %v676, %v678
        %v1060 = vmax.f32 %v1059, %v869
        %v1061 = vmax.f32 %v1060, %v871
        %1062 = vmax.xlane.f32.xlu0 %v1061
        %v1063 = vpop.xlane.xlu0 %1062
        %v1064 = vmax.f32 %v680, %v682
        %v1065 = vmax.f32 %v1064, %v873
        %v1066 = vmax.f32 %v1065, %v875
        %1067 = vmax.xlane.f32.xlu0 %v1066
        %v1068 = vpop.xlane.xlu0 %1067
        %v1069 = vmax.f32 %v686, %v688
        %v1070 = vmax.f32 %v1069, %v879
        %v1071 = vmax.f32 %v1070, %v881
        %1072 = vmax.xlane.f32.xlu0 %v1071
        %v1073 = vpop.xlane.xlu0 %1072
        %v1074 = vmax.f32 %v690, %v692
        %v1075 = vmax.f32 %v1074, %v883
        %v1076 = vmax.f32 %v1075, %v885
        %1077 = vmax.xlane.f32.xlu0 %v1076
        %v1078 = vpop.xlane.xlu0 %1077
        %v1079 = vmax.f32 %v696, %v698
        %v1080 = vmax.f32 %v1079, %v889
        %v1081 = vmax.f32 %v1080, %v891
        %1082 = vmax.xlane.f32.xlu0 %v1081
        %v1083 = vpop.xlane.xlu0 %1082
        %v1084 = vmax.f32 %v700, %v702
        %v1085 = vmax.f32 %v1084, %v893
        %v1086 = vmax.f32 %v1085, %v895
        %1087 = vmax.xlane.f32.xlu0 %v1086
        %v1088 = vpop.xlane.xlu0 %1087
        %v1089 = vmax.f32 %v706, %v708
        %v1090 = vmax.f32 %v1089, %v899
        %v1091 = vmax.f32 %v1090, %v901
        %1092 = vmax.xlane.f32.xlu0 %v1091
        %v1093 = vpop.xlane.xlu0 %1092
        %v1094 = vmax.f32 %v710, %v712
        %v1095 = vmax.f32 %v1094, %v903
        %v1096 = vmax.f32 %v1095, %v905
        %1097 = vmax.xlane.f32.xlu0 %v1096
        %v1098 = vpop.xlane.xlu0 %1097
        %v1099 = vmax.f32 %v716, %v718
        %v1100 = vmax.f32 %v1099, %v909
        %v1101 = vmax.f32 %v1100, %v911
        %1102 = vmax.xlane.f32.xlu0 %v1101
        %v1103 = vpop.xlane.xlu0 %1102
        %v1104 = vmax.f32 %v720, %v722
        %v1105 = vmax.f32 %v1104, %v913
        %v1106 = vmax.f32 %v1105, %v915
        %1107 = vmax.xlane.f32.xlu0 %v1106
        %v1108 = vpop.xlane.xlu0 %1107
        %v1109 = vmax.f32 %v726, %v728
        %v1110 = vmax.f32 %v1109, %v919
        %v1111 = vmax.f32 %v1110, %v921
        %1112 = vmax.xlane.f32.xlu0 %v1111
        %v1113 = vpop.xlane.xlu0 %1112
        %v1114 = vmax.f32 %v730, %v732
        %v1115 = vmax.f32 %v1114, %v923
        %v1116 = vmax.f32 %v1115, %v925
        %1117 = vmax.xlane.f32.xlu0 %v1116
        %v1118 = vpop.xlane.xlu0 %1117
        %v1119 = vmax.f32 %v736, %v738
        %v1120 = vmax.f32 %v1119, %v929
        %v1121 = vmax.f32 %v1120, %v931
        %1122 = vmax.xlane.f32.xlu0 %v1121
        %v1123 = vpop.xlane.xlu0 %1122
        %v1124 = vmax.f32 %v740, %v742
        %v1125 = vmax.f32 %v1124, %v933
        %v1126 = vmax.f32 %v1125, %v935
        %1127 = vmax.xlane.f32.xlu0 %v1126
        %v1128 = vpop.xlane.xlu0 %1127
        %v1129 = vmax.f32 %v746, %v748
        %v1130 = vmax.f32 %v1129, %v939
        %v1131 = vmax.f32 %v1130, %v941
        %1132 = vmax.xlane.f32.xlu0 %v1131
        %v1133 = vpop.xlane.xlu0 %1132
        %v1134 = vmax.f32 %v750, %v752
        %v1135 = vmax.f32 %v1134, %v943
        %v1136 = vmax.f32 %v1135, %v945
        %1137 = vmax.xlane.f32.xlu0 %v1136
        %v1138 = vpop.xlane.xlu0 %1137
        %v1139 = vmax.f32 %v947, %v983
        %v1140 = vmax.f32 %v948, %v988
        %v1141 = vmax.f32 %v949, %v993
        %v1142 = vmax.f32 %v950, %v998
        %v1143 = vmax.f32 %v951, %v1003
        %v1144 = vmax.f32 %v952, %v1008
        %v1145 = vmax.f32 %v953, %v1013
        %v1146 = vmax.f32 %v954, %v1018
        %v1147 = vmax.f32 %v955, %v1023
        %v1148 = vmax.f32 %v956, %v1028
        %v1149 = vmax.f32 %v957, %v1033
        %v1150 = vmax.f32 %v958, %v1038
        %v1151 = vmax.f32 %v959, %v1043
        %v1152 = vmax.f32 %v960, %v1048
        %v1153 = vmax.f32 %v961, %v1053
        %v1154 = vmax.f32 %v962, %v1058
        %v1155 = vmax.f32 %v963, %v1063
        %v1156 = vmax.f32 %v964, %v1068
        %v1157 = vmax.f32 %v965, %v1073
        %v1158 = vmax.f32 %v966, %v1078
        %v1159 = vmax.f32 %v967, %v1083
        %v1160 = vmax.f32 %v968, %v1088
        %v1161 = vmax.f32 %v969, %v1093
        %v1162 = vmax.f32 %v970, %v1098
        %v1163 = vmax.f32 %v971, %v1103
        %v1164 = vmax.f32 %v972, %v1108
        %v1165 = vmax.f32 %v973, %v1113
        %v1166 = vmax.f32 %v974, %v1118
        %v1167 = vmax.f32 %v975, %v1123
        %v1168 = vmax.f32 %v976, %v1128
        %v1169 = vmax.f32 %v977, %v1133
        %v1170 = vmax.f32 %v978, %v1138
        %v1171 = vld [vmem:[#allocation3] sm:$0xff]
        %v1172 = vld [vmem:[#allocation3 + $0x8] sm:$0xff]
        %v1173 = vld [vmem:[#allocation3 + $0x10] sm:$0xff]
        %v1174 = vld [vmem:[#allocation3 + $0x18] sm:$0xff]
        %v1175 = vld [vmem:[#allocation3 + $0x20] sm:$0xff]
        %v1176 = vld [vmem:[#allocation3 + $0x28] sm:$0xff]
        %v1177 = vld [vmem:[#allocation3 + $0x30] sm:$0xff]
        %v1178 = vld [vmem:[#allocation3 + $0x38] sm:$0xff]
        %v1179 = vld [vmem:[#allocation3 + $0x40] sm:$0xff]
        %v1180 = vld [vmem:[#allocation3 + $0x48] sm:$0xff]
        %v1181 = vld [vmem:[#allocation3 + $0x50] sm:$0xff]
        %v1182 = vld [vmem:[#allocation3 + $0x58] sm:$0xff]
        %v1183 = vld [vmem:[#allocation3 + $0x60] sm:$0xff]
        %v1184 = vld [vmem:[#allocation3 + $0x68] sm:$0xff]
        %v1185 = vld [vmem:[#allocation3 + $0x70] sm:$0xff]
        %v1186 = vld [vmem:[#allocation3 + $0x78] sm:$0xff]
        %v1187 = vld [vmem:[#allocation3 + $0x80] sm:$0xff]
        %v1188 = vld [vmem:[#allocation3 + $0x88] sm:$0xff]
        %v1189 = vld [vmem:[#allocation3 + $0x90] sm:$0xff]
        %v1190 = vld [vmem:[#allocation3 + $0x98] sm:$0xff]
        %v1191 = vld [vmem:[#allocation3 + $0xa0] sm:$0xff]
        %v1192 = vld [vmem:[#allocation3 + $0xa8] sm:$0xff]
        %v1193 = vld [vmem:[#allocation3 + $0xb0] sm:$0xff]
        %v1194 = vld [vmem:[#allocation3 + $0xb8] sm:$0xff]
        %v1195 = vld [vmem:[#allocation3 + $0xc0] sm:$0xff]
        %v1196 = vld [vmem:[#allocation3 + $0xc8] sm:$0xff]
        %v1197 = vld [vmem:[#allocation3 + $0xd0] sm:$0xff]
        %v1198 = vld [vmem:[#allocation3 + $0xd8] sm:$0xff]
        %v1199 = vld [vmem:[#allocation3 + $0xe0] sm:$0xff]
        %v1200 = vld [vmem:[#allocation3 + $0xe8] sm:$0xff]
        %v1201 = vld [vmem:[#allocation3 + $0xf0] sm:$0xff]
        %v1202 = vld [vmem:[#allocation3 + $0xf8] sm:$0xff]
        %v1203 = vsub.f32 %v947, %v1139
        %v1204 = vsub.f32 %v948, %v1140
        %v1205 = vsub.f32 %v949, %v1141
        %v1206 = vsub.f32 %v950, %v1142
        %v1207 = vsub.f32 %v951, %v1143
        %v1208 = vsub.f32 %v952, %v1144
        %v1209 = vsub.f32 %v953, %v1145
        %v1210 = vsub.f32 %v954, %v1146
        %v1211 = vsub.f32 %v955, %v1147
        %v1212 = vsub.f32 %v956, %v1148
        %v1213 = vsub.f32 %v957, %v1149
        %v1214 = vsub.f32 %v958, %v1150
        %v1215 = vsub.f32 %v959, %v1151
        %v1216 = vsub.f32 %v960, %v1152
        %v1217 = vsub.f32 %v961, %v1153
        %v1218 = vsub.f32 %v962, %v1154
        %v1219 = vsub.f32 %v963, %v1155
        %v1220 = vsub.f32 %v964, %v1156
        %v1221 = vsub.f32 %v965, %v1157
        %v1222 = vsub.f32 %v966, %v1158
        %v1223 = vsub.f32 %v967, %v1159
        %v1224 = vsub.f32 %v968, %v1160
        %v1225 = vsub.f32 %v969, %v1161
        %v1226 = vsub.f32 %v970, %v1162
        %v1227 = vsub.f32 %v971, %v1163
        %v1228 = vsub.f32 %v972, %v1164
        %v1229 = vsub.f32 %v973, %v1165
        %v1230 = vsub.f32 %v974, %v1166
        %v1231 = vsub.f32 %v975, %v1167
        %v1232 = vsub.f32 %v976, %v1168
        %v1233 = vsub.f32 %v977, %v1169
        %v1234 = vsub.f32 %v978, %v1170
        %v1235 = vmul.f32 %v1203, 1.442695
        %v1236 = vpow.pop %v1235
        %v1237 = vmul.f32 %v1204, 1.442695
        %v1238 = vpow.pop %v1237
        %v1239 = vmul.f32 %v1205, 1.442695
        %v1240 = vpow.pop %v1239
        %v1241 = vmul.f32 %v1206, 1.442695
        %v1242 = vpow.pop %v1241
        %v1243 = vmul.f32 %v1207, 1.442695
        %v1244 = vpow.pop %v1243
        %v1245 = vmul.f32 %v1208, 1.442695
        %v1246 = vpow.pop %v1245
        %v1247 = vmul.f32 %v1209, 1.442695
        %v1248 = vpow.pop %v1247
        %v1249 = vmul.f32 %v1210, 1.442695
        %v1250 = vpow.pop %v1249
        %v1251 = vmul.f32 %v1211, 1.442695
        %v1252 = vpow.pop %v1251
        %v1253 = vmul.f32 %v1212, 1.442695
        %v1254 = vpow.pop %v1253
        %v1255 = vmul.f32 %v1213, 1.442695
        %v1256 = vpow.pop %v1255
        %v1257 = vmul.f32 %v1214, 1.442695
        %v1258 = vpow.pop %v1257
        %v1259 = vmul.f32 %v1215, 1.442695
        %v1260 = vpow.pop %v1259
        %v1261 = vmul.f32 %v1216, 1.442695
        %v1262 = vpow.pop %v1261
        %v1263 = vmul.f32 %v1217, 1.442695
        %v1264 = vpow.pop %v1263
        %v1265 = vmul.f32 %v1218, 1.442695
        %v1266 = vpow.pop %v1265
        %v1267 = vmul.f32 %v1219, 1.442695
        %v1268 = vpow.pop %v1267
        %v1269 = vmul.f32 %v1220, 1.442695
        %v1270 = vpow.pop %v1269
        %v1271 = vmul.f32 %v1221, 1.442695
        %v1272 = vpow.pop %v1271
        %v1273 = vmul.f32 %v1222, 1.442695
        %v1274 = vpow.pop %v1273
        %v1275 = vmul.f32 %v1223, 1.442695
        %v1276 = vpow.pop %v1275
        %v1277 = vmul.f32 %v1224, 1.442695
        %v1278 = vpow.pop %v1277
        %v1279 = vmul.f32 %v1225, 1.442695
        %v1280 = vpow.pop %v1279
        %v1281 = vmul.f32 %v1226, 1.442695
        %v1282 = vpow.pop %v1281
        %v1283 = vmul.f32 %v1227, 1.442695
        %v1284 = vpow.pop %v1283
        %v1285 = vmul.f32 %v1228, 1.442695
        %v1286 = vpow.pop %v1285
        %v1287 = vmul.f32 %v1229, 1.442695
        %v1288 = vpow.pop %v1287
        %v1289 = vmul.f32 %v1230, 1.442695
        %v1290 = vpow.pop %v1289
        %v1291 = vmul.f32 %v1231, 1.442695
        %v1292 = vpow.pop %v1291
        %v1293 = vmul.f32 %v1232, 1.442695
        %v1294 = vpow.pop %v1293
        %v1295 = vmul.f32 %v1233, 1.442695
        %v1296 = vpow.pop %v1295
        %v1297 = vmul.f32 %v1234, 1.442695
        %v1298 = vpow.pop %v1297
        %v1299 = vmul.f32 %v1171, %v1236
        %v1300 = vmul.f32 %v1172, %v1238
        %v1301 = vmul.f32 %v1173, %v1240
        %v1302 = vmul.f32 %v1174, %v1242
        %v1303 = vmul.f32 %v1175, %v1244
        %v1304 = vmul.f32 %v1176, %v1246
        %v1305 = vmul.f32 %v1177, %v1248
        %v1306 = vmul.f32 %v1178, %v1250
        %v1307 = vmul.f32 %v1179, %v1252
        %v1308 = vmul.f32 %v1180, %v1254
        %v1309 = vmul.f32 %v1181, %v1256
        %v1310 = vmul.f32 %v1182, %v1258
        %v1311 = vmul.f32 %v1183, %v1260
        %v1312 = vmul.f32 %v1184, %v1262
        %v1313 = vmul.f32 %v1185, %v1264
        %v1314 = vmul.f32 %v1186, %v1266
        %v1315 = vmul.f32 %v1187, %v1268
        %v1316 = vmul.f32 %v1188, %v1270
        %v1317 = vmul.f32 %v1189, %v1272
        %v1318 = vmul.f32 %v1190, %v1274
        %v1319 = vmul.f32 %v1191, %v1276
        %v1320 = vmul.f32 %v1192, %v1278
        %v1321 = vmul.f32 %v1193, %v1280
        %v1322 = vmul.f32 %v1194, %v1282
        %v1323 = vmul.f32 %v1195, %v1284
        %v1324 = vmul.f32 %v1196, %v1286
        %v1325 = vmul.f32 %v1197, %v1288
        %v1326 = vmul.f32 %v1198, %v1290
        %v1327 = vmul.f32 %v1199, %v1292
        %v1328 = vmul.f32 %v1200, %v1294
        %v1329 = vmul.f32 %v1201, %v1296
        %v1330 = vmul.f32 %v1202, %v1298
        %1332 = vset.pattern.permute.xlu0 0
        %1333 = vperm.xlu0 %1332, %v1139
        %v1334 = vpop.permute.xlu0 %1333
        %1337 = vset.pattern.permute.xlu0 0
        %1338 = vperm.xlu0 %1337, %v1140
        %v1339 = vpop.permute.xlu0 %1338
        %1342 = vset.pattern.permute.xlu0 0
        %1343 = vperm.xlu0 %1342, %v1141
        %v1344 = vpop.permute.xlu0 %1343
        %1347 = vset.pattern.permute.xlu0 0
        %1348 = vperm.xlu0 %1347, %v1142
        %v1349 = vpop.permute.xlu0 %1348
        %1352 = vset.pattern.permute.xlu0 0
        %1353 = vperm.xlu0 %1352, %v1143
        %v1354 = vpop.permute.xlu0 %1353
        %1357 = vset.pattern.permute.xlu0 0
        %1358 = vperm.xlu0 %1357, %v1144
        %v1359 = vpop.permute.xlu0 %1358
        %1362 = vset.pattern.permute.xlu0 0
        %1363 = vperm.xlu0 %1362, %v1145
        %v1364 = vpop.permute.xlu0 %1363
        %1367 = vset.pattern.permute.xlu0 0
        %1368 = vperm.xlu0 %1367, %v1146
        %v1369 = vpop.permute.xlu0 %1368
        %1372 = vset.pattern.permute.xlu0 0
        %1373 = vperm.xlu0 %1372, %v1147
        %v1374 = vpop.permute.xlu0 %1373
        %1377 = vset.pattern.permute.xlu0 0
        %1378 = vperm.xlu0 %1377, %v1148
        %v1379 = vpop.permute.xlu0 %1378
        %1382 = vset.pattern.permute.xlu0 0
        %1383 = vperm.xlu0 %1382, %v1149
        %v1384 = vpop.permute.xlu0 %1383
        %1387 = vset.pattern.permute.xlu0 0
        %1388 = vperm.xlu0 %1387, %v1150
        %v1389 = vpop.permute.xlu0 %1388
        %1392 = vset.pattern.permute.xlu0 0
        %1393 = vperm.xlu0 %1392, %v1151
        %v1394 = vpop.permute.xlu0 %1393
        %1397 = vset.pattern.permute.xlu0 0
        %1398 = vperm.xlu0 %1397, %v1152
        %v1399 = vpop.permute.xlu0 %1398
        %1402 = vset.pattern.permute.xlu0 0
        %1403 = vperm.xlu0 %1402, %v1153
        %v1404 = vpop.permute.xlu0 %1403
        %1407 = vset.pattern.permute.xlu0 0
        %1408 = vperm.xlu0 %1407, %v1154
        %v1409 = vpop.permute.xlu0 %1408
        %1412 = vset.pattern.permute.xlu0 0
        %1413 = vperm.xlu0 %1412, %v1155
        %v1414 = vpop.permute.xlu0 %1413
        %1417 = vset.pattern.permute.xlu0 0
        %1418 = vperm.xlu0 %1417, %v1156
        %v1419 = vpop.permute.xlu0 %1418
        %1422 = vset.pattern.permute.xlu0 0
        %1423 = vperm.xlu0 %1422, %v1157
        %v1424 = vpop.permute.xlu0 %1423
        %1427 = vset.pattern.permute.xlu0 0
        %1428 = vperm.xlu0 %1427, %v1158
        %v1429 = vpop.permute.xlu0 %1428
        %1432 = vset.pattern.permute.xlu0 0
        %1433 = vperm.xlu0 %1432, %v1159
        %v1434 = vpop.permute.xlu0 %1433
        %1437 = vset.pattern.permute.xlu0 0
        %1438 = vperm.xlu0 %1437, %v1160
        %v1439 = vpop.permute.xlu0 %1438
        %1442 = vset.pattern.permute.xlu0 0
        %1443 = vperm.xlu0 %1442, %v1161
        %v1444 = vpop.permute.xlu0 %1443
        %1447 = vset.pattern.permute.xlu0 0
        %1448 = vperm.xlu0 %1447, %v1162
        %v1449 = vpop.permute.xlu0 %1448
        %1452 = vset.pattern.permute.xlu0 0
        %1453 = vperm.xlu0 %1452, %v1163
        %v1454 = vpop.permute.xlu0 %1453
        %1457 = vset.pattern.permute.xlu0 0
        %1458 = vperm.xlu0 %1457, %v1164
        %v1459 = vpop.permute.xlu0 %1458
        %1462 = vset.pattern.permute.xlu0 0
        %1463 = vperm.xlu0 %1462, %v1165
        %v1464 = vpop.permute.xlu0 %1463
        %1467 = vset.pattern.permute.xlu0 0
        %1468 = vperm.xlu0 %1467, %v1166
        %v1469 = vpop.permute.xlu0 %1468
        %1472 = vset.pattern.permute.xlu0 0
        %1473 = vperm.xlu0 %1472, %v1167
        %v1474 = vpop.permute.xlu0 %1473
        %1477 = vset.pattern.permute.xlu0 0
        %1478 = vperm.xlu0 %1477, %v1168
        %v1479 = vpop.permute.xlu0 %1478
        %1482 = vset.pattern.permute.xlu0 0
        %1483 = vperm.xlu0 %1482, %v1169
        %v1484 = vpop.permute.xlu0 %1483
        %1487 = vset.pattern.permute.xlu0 0
        %1488 = vperm.xlu0 %1487, %v1170
        %v1489 = vpop.permute.xlu0 %1488
        %v1491 = vsub.f32 %v596, %v1334
        %v1492 = vsub.f32 %v598, %v1334
        %v1493 = vsub.f32 %v789, %v1334
        %v1494 = vsub.f32 %v791, %v1334
        %v1495 = vsub.f32 %v600, %v1339
        %v1496 = vsub.f32 %v602, %v1339
        %v1497 = vsub.f32 %v793, %v1339
        %v1498 = vsub.f32 %v795, %v1339
        %v1499 = vsub.f32 %v606, %v1344
        %v1500 = vsub.f32 %v608, %v1344
        %v1501 = vsub.f32 %v799, %v1344
        %v1502 = vsub.f32 %v801, %v1344
        %v1503 = vsub.f32 %v610, %v1349
        %v1504 = vsub.f32 %v612, %v1349
        %v1505 = vsub.f32 %v803, %v1349
        %v1506 = vsub.f32 %v805, %v1349
        %v1507 = vsub.f32 %v616, %v1354
        %v1508 = vsub.f32 %v618, %v1354
        %v1509 = vsub.f32 %v809, %v1354
        %v1510 = vsub.f32 %v811, %v1354
        %v1511 = vsub.f32 %v620, %v1359
        %v1512 = vsub.f32 %v622, %v1359
        %v1513 = vsub.f32 %v813, %v1359
        %v1514 = vsub.f32 %v815, %v1359
        %v1515 = vsub.f32 %v626, %v1364
        %v1516 = vsub.f32 %v628, %v1364
        %v1517 = vsub.f32 %v819, %v1364
        %v1518 = vsub.f32 %v821, %v1364
        %v1519 = vsub.f32 %v630, %v1369
        %v1520 = vsub.f32 %v632, %v1369
        %v1521 = vsub.f32 %v823, %v1369
        %v1522 = vsub.f32 %v825, %v1369
        %v1523 = vsub.f32 %v636, %v1374
        %v1524 = vsub.f32 %v638, %v1374
        %v1525 = vsub.f32 %v829, %v1374
        %v1526 = vsub.f32 %v831, %v1374
        %v1527 = vsub.f32 %v640, %v1379
        %v1528 = vsub.f32 %v642, %v1379
        %v1529 = vsub.f32 %v833, %v1379
        %v1530 = vsub.f32 %v835, %v1379
        %v1531 = vsub.f32 %v646, %v1384
        %v1532 = vsub.f32 %v648, %v1384
        %v1533 = vsub.f32 %v839, %v1384
        %v1534 = vsub.f32 %v841, %v1384
        %v1535 = vsub.f32 %v650, %v1389
        %v1536 = vsub.f32 %v652, %v1389
        %v1537 = vsub.f32 %v843, %v1389
        %v1538 = vsub.f32 %v845, %v1389
        %v1539 = vsub.f32 %v656, %v1394
        %v1540 = vsub.f32 %v658, %v1394
        %v1541 = vsub.f32 %v849, %v1394
        %v1542 = vsub.f32 %v851, %v1394
        %v1543 = vsub.f32 %v660, %v1399
        %v1544 = vsub.f32 %v662, %v1399
        %v1545 = vsub.f32 %v853, %v1399
        %v1546 = vsub.f32 %v855, %v1399
        %v1547 = vsub.f32 %v666, %v1404
        %v1548 = vsub.f32 %v668, %v1404
        %v1549 = vsub.f32 %v859, %v1404
        %v1550 = vsub.f32 %v861, %v1404
        %v1551 = vsub.f32 %v670, %v1409
        %v1552 = vsub.f32 %v672, %v1409
        %v1553 = vsub.f32 %v863, %v1409
        %v1554 = vsub.f32 %v865, %v1409
        %v1555 = vsub.f32 %v676, %v1414
        %v1556 = vsub.f32 %v678, %v1414
        %v1557 = vsub.f32 %v869, %v1414
        %v1558 = vsub.f32 %v871, %v1414
        %v1559 = vsub.f32 %v680, %v1419
        %v1560 = vsub.f32 %v682, %v1419
        %v1561 = vsub.f32 %v873, %v1419
        %v1562 = vsub.f32 %v875, %v1419
        %v1563 = vsub.f32 %v686, %v1424
        %v1564 = vsub.f32 %v688, %v1424
        %v1565 = vsub.f32 %v879, %v1424
        %v1566 = vsub.f32 %v881, %v1424
        %v1567 = vsub.f32 %v690, %v1429
        %v1568 = vsub.f32 %v692, %v1429
        %v1569 = vsub.f32 %v883, %v1429
        %v1570 = vsub.f32 %v885, %v1429
        %v1571 = vsub.f32 %v696, %v1434
        %v1572 = vsub.f32 %v698, %v1434
        %v1573 = vsub.f32 %v889, %v1434
        %v1574 = vsub.f32 %v891, %v1434
        %v1575 = vsub.f32 %v700, %v1439
        %v1576 = vsub.f32 %v702, %v1439
        %v1577 = vsub.f32 %v893, %v1439
        %v1578 = vsub.f32 %v895, %v1439
        %v1579 = vsub.f32 %v706, %v1444
        %v1580 = vsub.f32 %v708, %v1444
        %v1581 = vsub.f32 %v899, %v1444
        %v1582 = vsub.f32 %v901, %v1444
        %v1583 = vsub.f32 %v710, %v1449
        %v1584 = vsub.f32 %v712, %v1449
        %v1585 = vsub.f32 %v903, %v1449
        %v1586 = vsub.f32 %v905, %v1449
        %v1587 = vsub.f32 %v716, %v1454
        %v1588 = vsub.f32 %v718, %v1454
        %v1589 = vsub.f32 %v909, %v1454
        %v1590 = vsub.f32 %v911, %v1454
        %v1591 = vsub.f32 %v720, %v1459
        %v1592 = vsub.f32 %v722, %v1459
        %v1593 = vsub.f32 %v913, %v1459
        %v1594 = vsub.f32 %v915, %v1459
        %v1595 = vsub.f32 %v726, %v1464
        %v1596 = vsub.f32 %v728, %v1464
        %v1597 = vsub.f32 %v919, %v1464
        %v1598 = vsub.f32 %v921, %v1464
        %v1599 = vsub.f32 %v730, %v1469
        %v1600 = vsub.f32 %v732, %v1469
        %v1601 = vsub.f32 %v923, %v1469
        %v1602 = vsub.f32 %v925, %v1469
        %v1603 = vsub.f32 %v736, %v1474
        %v1604 = vsub.f32 %v738, %v1474
        %v1605 = vsub.f32 %v929, %v1474
        %v1606 = vsub.f32 %v931, %v1474
        %v1607 = vsub.f32 %v740, %v1479
        %v1608 = vsub.f32 %v742, %v1479
        %v1609 = vsub.f32 %v933, %v1479
        %v1610 = vsub.f32 %v935, %v1479
        %v1611 = vsub.f32 %v746, %v1484
        %v1612 = vsub.f32 %v748, %v1484
        %v1613 = vsub.f32 %v939, %v1484
        %v1614 = vsub.f32 %v941, %v1484
        %v1615 = vsub.f32 %v750, %v1489
        %v1616 = vsub.f32 %v752, %v1489
        %v1617 = vsub.f32 %v943, %v1489
        %v1618 = vsub.f32 %v945, %v1489
        %v1619 = vmul.f32 %v1491, 1.442695
        %v1620 = vpow.pop %v1619
        %v1621 = vmul.f32 %v1492, 1.442695
        %v1622 = vpow.pop %v1621
        %v1623 = vmul.f32 %v1493, 1.442695
        %v1624 = vpow.pop %v1623
        %v1625 = vmul.f32 %v1494, 1.442695
        %v1626 = vpow.pop %v1625
        %v1627 = vmul.f32 %v1495, 1.442695
        %v1628 = vpow.pop %v1627
        %v1629 = vmul.f32 %v1496, 1.442695
        %v1630 = vpow.pop %v1629
        %v1631 = vmul.f32 %v1497, 1.442695
        %v1632 = vpow.pop %v1631
        %v1633 = vmul.f32 %v1498, 1.442695
        %v1634 = vpow.pop %v1633
        %v1635 = vmul.f32 %v1499, 1.442695
        %v1636 = vpow.pop %v1635
        %v1637 = vmul.f32 %v1500, 1.442695
        %v1638 = vpow.pop %v1637
        %v1639 = vmul.f32 %v1501, 1.442695
        %v1640 = vpow.pop %v1639
        %v1641 = vmul.f32 %v1502, 1.442695
        %v1642 = vpow.pop %v1641
        %v1643 = vmul.f32 %v1503, 1.442695
        %v1644 = vpow.pop %v1643
        %v1645 = vmul.f32 %v1504, 1.442695
        %v1646 = vpow.pop %v1645
        %v1647 = vmul.f32 %v1505, 1.442695
        %v1648 = vpow.pop %v1647
        %v1649 = vmul.f32 %v1506, 1.442695
        %v1650 = vpow.pop %v1649
        %v1651 = vmul.f32 %v1507, 1.442695
        %v1652 = vpow.pop %v1651
        %v1653 = vmul.f32 %v1508, 1.442695
        %v1654 = vpow.pop %v1653
        %v1655 = vmul.f32 %v1509, 1.442695
        %v1656 = vpow.pop %v1655
        %v1657 = vmul.f32 %v1510, 1.442695
        %v1658 = vpow.pop %v1657
        %v1659 = vmul.f32 %v1511, 1.442695
        %v1660 = vpow.pop %v1659
        %v1661 = vmul.f32 %v1512, 1.442695
        %v1662 = vpow.pop %v1661
        %v1663 = vmul.f32 %v1513, 1.442695
        %v1664 = vpow.pop %v1663
        %v1665 = vmul.f32 %v1514, 1.442695
        %v1666 = vpow.pop %v1665
        %v1667 = vmul.f32 %v1515, 1.442695
        %v1668 = vpow.pop %v1667
        %v1669 = vmul.f32 %v1516, 1.442695
        %v1670 = vpow.pop %v1669
        %v1671 = vmul.f32 %v1517, 1.442695
        %v1672 = vpow.pop %v1671
        %v1673 = vmul.f32 %v1518, 1.442695
        %v1674 = vpow.pop %v1673
        %v1675 = vmul.f32 %v1519, 1.442695
        %v1676 = vpow.pop %v1675
        %v1677 = vmul.f32 %v1520, 1.442695
        %v1678 = vpow.pop %v1677
        %v1679 = vmul.f32 %v1521, 1.442695
        %v1680 = vpow.pop %v1679
        %v1681 = vmul.f32 %v1522, 1.442695
        %v1682 = vpow.pop %v1681
        %v1683 = vmul.f32 %v1523, 1.442695
        %v1684 = vpow.pop %v1683
        %v1685 = vmul.f32 %v1524, 1.442695
        %v1686 = vpow.pop %v1685
        %v1687 = vmul.f32 %v1525, 1.442695
        %v1688 = vpow.pop %v1687
        %v1689 = vmul.f32 %v1526, 1.442695
        %v1690 = vpow.pop %v1689
        %v1691 = vmul.f32 %v1527, 1.442695
        %v1692 = vpow.pop %v1691
        %v1693 = vmul.f32 %v1528, 1.442695
        %v1694 = vpow.pop %v1693
        %v1695 = vmul.f32 %v1529, 1.442695
        %v1696 = vpow.pop %v1695
        %v1697 = vmul.f32 %v1530, 1.442695
        %v1698 = vpow.pop %v1697
        %v1699 = vmul.f32 %v1531, 1.442695
        %v1700 = vpow.pop %v1699
        %v1701 = vmul.f32 %v1532, 1.442695
        %v1702 = vpow.pop %v1701
        %v1703 = vmul.f32 %v1533, 1.442695
        %v1704 = vpow.pop %v1703
        %v1705 = vmul.f32 %v1534, 1.442695
        %v1706 = vpow.pop %v1705
        %v1707 = vmul.f32 %v1535, 1.442695
        %v1708 = vpow.pop %v1707
        %v1709 = vmul.f32 %v1536, 1.442695
        %v1710 = vpow.pop %v1709
        %v1711 = vmul.f32 %v1537, 1.442695
        %v1712 = vpow.pop %v1711
        %v1713 = vmul.f32 %v1538, 1.442695
        %v1714 = vpow.pop %v1713
        %v1715 = vmul.f32 %v1539, 1.442695
        %v1716 = vpow.pop %v1715
        %v1717 = vmul.f32 %v1540, 1.442695
        %v1718 = vpow.pop %v1717
        %v1719 = vmul.f32 %v1541, 1.442695
        %v1720 = vpow.pop %v1719
        %v1721 = vmul.f32 %v1542, 1.442695
        %v1722 = vpow.pop %v1721
        %v1723 = vmul.f32 %v1543, 1.442695
        %v1724 = vpow.pop %v1723
        %v1725 = vmul.f32 %v1544, 1.442695
        %v1726 = vpow.pop %v1725
        %v1727 = vmul.f32 %v1545, 1.442695
        %v1728 = vpow.pop %v1727
        %v1729 = vmul.f32 %v1546, 1.442695
        %v1730 = vpow.pop %v1729
        %v1731 = vmul.f32 %v1547, 1.442695
        %v1732 = vpow.pop %v1731
        %v1733 = vmul.f32 %v1548, 1.442695
        %v1734 = vpow.pop %v1733
        %v1735 = vmul.f32 %v1549, 1.442695
        %v1736 = vpow.pop %v1735
        %v1737 = vmul.f32 %v1550, 1.442695
        %v1738 = vpow.pop %v1737
        %v1739 = vmul.f32 %v1551, 1.442695
        %v1740 = vpow.pop %v1739
        %v1741 = vmul.f32 %v1552, 1.442695
        %v1742 = vpow.pop %v1741
        %v1743 = vmul.f32 %v1553, 1.442695
        %v1744 = vpow.pop %v1743
        %v1745 = vmul.f32 %v1554, 1.442695
        %v1746 = vpow.pop %v1745
        %v1747 = vmul.f32 %v1555, 1.442695
        %v1748 = vpow.pop %v1747
        %v1749 = vmul.f32 %v1556, 1.442695
        %v1750 = vpow.pop %v1749
        %v1751 = vmul.f32 %v1557, 1.442695
        %v1752 = vpow.pop %v1751
        %v1753 = vmul.f32 %v1558, 1.442695
        %v1754 = vpow.pop %v1753
        %v1755 = vmul.f32 %v1559, 1.442695
        %v1756 = vpow.pop %v1755
        %v1757 = vmul.f32 %v1560, 1.442695
        %v1758 = vpow.pop %v1757
        %v1759 = vmul.f32 %v1561, 1.442695
        %v1760 = vpow.pop %v1759
        %v1761 = vmul.f32 %v1562, 1.442695
        %v1762 = vpow.pop %v1761
        %v1763 = vmul.f32 %v1563, 1.442695
        %v1764 = vpow.pop %v1763
        %v1765 = vmul.f32 %v1564, 1.442695
        %v1766 = vpow.pop %v1765
        %v1767 = vmul.f32 %v1565, 1.442695
        %v1768 = vpow.pop %v1767
        %v1769 = vmul.f32 %v1566, 1.442695
        %v1770 = vpow.pop %v1769
        %v1771 = vmul.f32 %v1567, 1.442695
        %v1772 = vpow.pop %v1771
        %v1773 = vmul.f32 %v1568, 1.442695
        %v1774 = vpow.pop %v1773
        %v1775 = vmul.f32 %v1569, 1.442695
        %v1776 = vpow.pop %v1775
        %v1777 = vmul.f32 %v1570, 1.442695
        %v1778 = vpow.pop %v1777
        %v1779 = vmul.f32 %v1571, 1.442695
        %v1780 = vpow.pop %v1779
        %v1781 = vmul.f32 %v1572, 1.442695
        %v1782 = vpow.pop %v1781
        %v1783 = vmul.f32 %v1573, 1.442695
        %v1784 = vpow.pop %v1783
        %v1785 = vmul.f32 %v1574, 1.442695
        %v1786 = vpow.pop %v1785
        %v1787 = vmul.f32 %v1575, 1.442695
        %v1788 = vpow.pop %v1787
        %v1789 = vmul.f32 %v1576, 1.442695
        %v1790 = vpow.pop %v1789
        %v1791 = vmul.f32 %v1577, 1.442695
        %v1792 = vpow.pop %v1791
        %v1793 = vmul.f32 %v1578, 1.442695
        %v1794 = vpow.pop %v1793
        %v1795 = vmul.f32 %v1579, 1.442695
        %v1796 = vpow.pop %v1795
        %v1797 = vmul.f32 %v1580, 1.442695
        %v1798 = vpow.pop %v1797
        %v1799 = vmul.f32 %v1581, 1.442695
        %v1800 = vpow.pop %v1799
        %v1801 = vmul.f32 %v1582, 1.442695
        %v1802 = vpow.pop %v1801
        %v1803 = vmul.f32 %v1583, 1.442695
        %v1804 = vpow.pop %v1803
        %v1805 = vmul.f32 %v1584, 1.442695
        %v1806 = vpow.pop %v1805
        %v1807 = vmul.f32 %v1585, 1.442695
        %v1808 = vpow.pop %v1807
        %v1809 = vmul.f32 %v1586, 1.442695
        %v1810 = vpow.pop %v1809
        %v1811 = vmul.f32 %v1587, 1.442695
        %v1812 = vpow.pop %v1811
        %v1813 = vmul.f32 %v1588, 1.442695
        %v1814 = vpow.pop %v1813
        %v1815 = vmul.f32 %v1589, 1.442695
        %v1816 = vpow.pop %v1815
        %v1817 = vmul.f32 %v1590, 1.442695
        %v1818 = vpow.pop %v1817
        %v1819 = vmul.f32 %v1591, 1.442695
        %v1820 = vpow.pop %v1819
        %v1821 = vmul.f32 %v1592, 1.442695
        %v1822 = vpow.pop %v1821
        %v1823 = vmul.f32 %v1593, 1.442695
        %v1824 = vpow.pop %v1823
        %v1825 = vmul.f32 %v1594, 1.442695
        %v1826 = vpow.pop %v1825
        %v1827 = vmul.f32 %v1595, 1.442695
        %v1828 = vpow.pop %v1827
        %v1829 = vmul.f32 %v1596, 1.442695
        %v1830 = vpow.pop %v1829
        %v1831 = vmul.f32 %v1597, 1.442695
        %v1832 = vpow.pop %v1831
        %v1833 = vmul.f32 %v1598, 1.442695
        %v1834 = vpow.pop %v1833
        %v1835 = vmul.f32 %v1599, 1.442695
        %v1836 = vpow.pop %v1835
        %v1837 = vmul.f32 %v1600, 1.442695
        %v1838 = vpow.pop %v1837
        %v1839 = vmul.f32 %v1601, 1.442695
        %v1840 = vpow.pop %v1839
        %v1841 = vmul.f32 %v1602, 1.442695
        %v1842 = vpow.pop %v1841
        %v1843 = vmul.f32 %v1603, 1.442695
        %v1844 = vpow.pop %v1843
        %v1845 = vmul.f32 %v1604, 1.442695
        %v1846 = vpow.pop %v1845
        %v1847 = vmul.f32 %v1605, 1.442695
        %v1848 = vpow.pop %v1847
        %v1849 = vmul.f32 %v1606, 1.442695
        %v1850 = vpow.pop %v1849
        %v1851 = vmul.f32 %v1607, 1.442695
        %v1852 = vpow.pop %v1851
        %v1853 = vmul.f32 %v1608, 1.442695
        %v1854 = vpow.pop %v1853
        %v1855 = vmul.f32 %v1609, 1.442695
        %v1856 = vpow.pop %v1855
        %v1857 = vmul.f32 %v1610, 1.442695
        %v1858 = vpow.pop %v1857
        %v1859 = vmul.f32 %v1611, 1.442695
        %v1860 = vpow.pop %v1859
        %v1861 = vmul.f32 %v1612, 1.442695
        %v1862 = vpow.pop %v1861
        %v1863 = vmul.f32 %v1613, 1.442695
        %v1864 = vpow.pop %v1863
        %v1865 = vmul.f32 %v1614, 1.442695
        %v1866 = vpow.pop %v1865
        %v1867 = vmul.f32 %v1615, 1.442695
        %v1868 = vpow.pop %v1867
        %v1869 = vmul.f32 %v1616, 1.442695
        %v1870 = vpow.pop %v1869
        %v1871 = vmul.f32 %v1617, 1.442695
        %v1872 = vpow.pop %v1871
        %v1873 = vmul.f32 %v1618, 1.442695
        %v1874 = vpow.pop %v1873
        %v1875 = vadd.f32 %v1620, %v1622
        %v1876 = vadd.f32 %v1875, %v1624
        %v1877 = vadd.f32 %v1876, %v1626
        %1878 = vadd.xlane.f32.xlu0 %v1877
        %v1879 = vpop.xlane.xlu0 %1878
        %v1880 = vadd.f32 %v1628, %v1630
        %v1881 = vadd.f32 %v1880, %v1632
        %v1882 = vadd.f32 %v1881, %v1634
        %1883 = vadd.xlane.f32.xlu0 %v1882
        %v1884 = vpop.xlane.xlu0 %1883
        %v1885 = vadd.f32 %v1636, %v1638
        %v1886 = vadd.f32 %v1885, %v1640
        %v1887 = vadd.f32 %v1886, %v1642
        %1888 = vadd.xlane.f32.xlu0 %v1887
        %v1889 = vpop.xlane.xlu0 %1888
        %v1890 = vadd.f32 %v1644, %v1646
        %v1891 = vadd.f32 %v1890, %v1648
        %v1892 = vadd.f32 %v1891, %v1650
        %1893 = vadd.xlane.f32.xlu0 %v1892
        %v1894 = vpop.xlane.xlu0 %1893
        %v1895 = vadd.f32 %v1652, %v1654
        %v1896 = vadd.f32 %v1895, %v1656
        %v1897 = vadd.f32 %v1896, %v1658
        %1898 = vadd.xlane.f32.xlu0 %v1897
        %v1899 = vpop.xlane.xlu0 %1898
        %v1900 = vadd.f32 %v1660, %v1662
        %v1901 = vadd.f32 %v1900, %v1664
        %v1902 = vadd.f32 %v1901, %v1666
        %1903 = vadd.xlane.f32.xlu0 %v1902
        %v1904 = vpop.xlane.xlu0 %1903
        %v1905 = vadd.f32 %v1668, %v1670
        %v1906 = vadd.f32 %v1905, %v1672
        %v1907 = vadd.f32 %v1906, %v1674
        %1908 = vadd.xlane.f32.xlu0 %v1907
        %v1909 = vpop.xlane.xlu0 %1908
        %v1910 = vadd.f32 %v1676, %v1678
        %v1911 = vadd.f32 %v1910, %v1680
        %v1912 = vadd.f32 %v1911, %v1682
        %1913 = vadd.xlane.f32.xlu0 %v1912
        %v1914 = vpop.xlane.xlu0 %1913
        %v1915 = vadd.f32 %v1684, %v1686
        %v1916 = vadd.f32 %v1915, %v1688
        %v1917 = vadd.f32 %v1916, %v1690
        %1918 = vadd.xlane.f32.xlu0 %v1917
        %v1919 = vpop.xlane.xlu0 %1918
        %v1920 = vadd.f32 %v1692, %v1694
        %v1921 = vadd.f32 %v1920, %v1696
        %v1922 = vadd.f32 %v1921, %v1698
        %1923 = vadd.xlane.f32.xlu0 %v1922
        %v1924 = vpop.xlane.xlu0 %1923
        %v1925 = vadd.f32 %v1700, %v1702
        %v1926 = vadd.f32 %v1925, %v1704
        %v1927 = vadd.f32 %v1926, %v1706
        %1928 = vadd.xlane.f32.xlu0 %v1927
        %v1929 = vpop.xlane.xlu0 %1928
        %v1930 = vadd.f32 %v1708, %v1710
        %v1931 = vadd.f32 %v1930, %v1712
        %v1932 = vadd.f32 %v1931, %v1714
        %1933 = vadd.xlane.f32.xlu0 %v1932
        %v1934 = vpop.xlane.xlu0 %1933
        %v1935 = vadd.f32 %v1716, %v1718
        %v1936 = vadd.f32 %v1935, %v1720
        %v1937 = vadd.f32 %v1936, %v1722
        %1938 = vadd.xlane.f32.xlu0 %v1937
        %v1939 = vpop.xlane.xlu0 %1938
        %v1940 = vadd.f32 %v1724, %v1726
        %v1941 = vadd.f32 %v1940, %v1728
        %v1942 = vadd.f32 %v1941, %v1730
        %1943 = vadd.xlane.f32.xlu0 %v1942
        %v1944 = vpop.xlane.xlu0 %1943
        %v1945 = vadd.f32 %v1732, %v1734
        %v1946 = vadd.f32 %v1945, %v1736
        %v1947 = vadd.f32 %v1946, %v1738
        %1948 = vadd.xlane.f32.xlu0 %v1947
        %v1949 = vpop.xlane.xlu0 %1948
        %v1950 = vadd.f32 %v1740, %v1742
        %v1951 = vadd.f32 %v1950, %v1744
        %v1952 = vadd.f32 %v1951, %v1746
        %1953 = vadd.xlane.f32.xlu0 %v1952
        %v1954 = vpop.xlane.xlu0 %1953
        %v1955 = vadd.f32 %v1748, %v1750
        %v1956 = vadd.f32 %v1955, %v1752
        %v1957 = vadd.f32 %v1956, %v1754
        %1958 = vadd.xlane.f32.xlu0 %v1957
        %v1959 = vpop.xlane.xlu0 %1958
        %v1960 = vadd.f32 %v1756, %v1758
        %v1961 = vadd.f32 %v1960, %v1760
        %v1962 = vadd.f32 %v1961, %v1762
        %1963 = vadd.xlane.f32.xlu0 %v1962
        %v1964 = vpop.xlane.xlu0 %1963
        %v1965 = vadd.f32 %v1764, %v1766
        %v1966 = vadd.f32 %v1965, %v1768
        %v1967 = vadd.f32 %v1966, %v1770
        %1968 = vadd.xlane.f32.xlu0 %v1967
        %v1969 = vpop.xlane.xlu0 %1968
        %v1970 = vadd.f32 %v1772, %v1774
        %v1971 = vadd.f32 %v1970, %v1776
        %v1972 = vadd.f32 %v1971, %v1778
        %1973 = vadd.xlane.f32.xlu0 %v1972
        %v1974 = vpop.xlane.xlu0 %1973
        %v1975 = vadd.f32 %v1780, %v1782
        %v1976 = vadd.f32 %v1975, %v1784
        %v1977 = vadd.f32 %v1976, %v1786
        %1978 = vadd.xlane.f32.xlu0 %v1977
        %v1979 = vpop.xlane.xlu0 %1978
        %v1980 = vadd.f32 %v1788, %v1790
        %v1981 = vadd.f32 %v1980, %v1792
        %v1982 = vadd.f32 %v1981, %v1794
        %1983 = vadd.xlane.f32.xlu0 %v1982
        %v1984 = vpop.xlane.xlu0 %1983
        %v1985 = vadd.f32 %v1796, %v1798
        %v1986 = vadd.f32 %v1985, %v1800
        %v1987 = vadd.f32 %v1986, %v1802
        %1988 = vadd.xlane.f32.xlu0 %v1987
        %v1989 = vpop.xlane.xlu0 %1988
        %v1990 = vadd.f32 %v1804, %v1806
        %v1991 = vadd.f32 %v1990, %v1808
        %v1992 = vadd.f32 %v1991, %v1810
        %1993 = vadd.xlane.f32.xlu0 %v1992
        %v1994 = vpop.xlane.xlu0 %1993
        %v1995 = vadd.f32 %v1812, %v1814
        %v1996 = vadd.f32 %v1995, %v1816
        %v1997 = vadd.f32 %v1996, %v1818
        %1998 = vadd.xlane.f32.xlu0 %v1997
        %v1999 = vpop.xlane.xlu0 %1998
        %v2000 = vadd.f32 %v1820, %v1822
        %v2001 = vadd.f32 %v2000, %v1824
        %v2002 = vadd.f32 %v2001, %v1826
        %2003 = vadd.xlane.f32.xlu0 %v2002
        %v2004 = vpop.xlane.xlu0 %2003
        %v2005 = vadd.f32 %v1828, %v1830
        %v2006 = vadd.f32 %v2005, %v1832
        %v2007 = vadd.f32 %v2006, %v1834
        %2008 = vadd.xlane.f32.xlu0 %v2007
        %v2009 = vpop.xlane.xlu0 %2008
        %v2010 = vadd.f32 %v1836, %v1838
        %v2011 = vadd.f32 %v2010, %v1840
        %v2012 = vadd.f32 %v2011, %v1842
        %2013 = vadd.xlane.f32.xlu0 %v2012
        %v2014 = vpop.xlane.xlu0 %2013
        %v2015 = vadd.f32 %v1844, %v1846
        %v2016 = vadd.f32 %v2015, %v1848
        %v2017 = vadd.f32 %v2016, %v1850
        %2018 = vadd.xlane.f32.xlu0 %v2017
        %v2019 = vpop.xlane.xlu0 %2018
        %v2020 = vadd.f32 %v1852, %v1854
        %v2021 = vadd.f32 %v2020, %v1856
        %v2022 = vadd.f32 %v2021, %v1858
        %2023 = vadd.xlane.f32.xlu0 %v2022
        %v2024 = vpop.xlane.xlu0 %2023
        %v2025 = vadd.f32 %v1860, %v1862
        %v2026 = vadd.f32 %v2025, %v1864
        %v2027 = vadd.f32 %v2026, %v1866
        %2028 = vadd.xlane.f32.xlu0 %v2027
        %v2029 = vpop.xlane.xlu0 %2028
        %v2030 = vadd.f32 %v1868, %v1870
        %v2031 = vadd.f32 %v2030, %v1872
        %v2032 = vadd.f32 %v2031, %v1874
        %2033 = vadd.xlane.f32.xlu0 %v2032
        %v2034 = vpop.xlane.xlu0 %2033
        %v2035 = vadd.f32 %v1299, %v1879
        %v2036 = vadd.f32 %v1300, %v1884
        %v2037 = vadd.f32 %v1301, %v1889
        %v2038 = vadd.f32 %v1302, %v1894
        %v2039 = vadd.f32 %v1303, %v1899
        %v2040 = vadd.f32 %v1304, %v1904
        %v2041 = vadd.f32 %v1305, %v1909
        %v2042 = vadd.f32 %v1306, %v1914
        %v2043 = vadd.f32 %v1307, %v1919
        %v2044 = vadd.f32 %v1308, %v1924
        %v2045 = vadd.f32 %v1309, %v1929
        %v2046 = vadd.f32 %v1310, %v1934
        %v2047 = vadd.f32 %v1311, %v1939
        %v2048 = vadd.f32 %v1312, %v1944
        %v2049 = vadd.f32 %v1313, %v1949
        %v2050 = vadd.f32 %v1314, %v1954
        %v2051 = vadd.f32 %v1315, %v1959
        %v2052 = vadd.f32 %v1316, %v1964
        %v2053 = vadd.f32 %v1317, %v1969
        %v2054 = vadd.f32 %v1318, %v1974
        %v2055 = vadd.f32 %v1319, %v1979
        %v2056 = vadd.f32 %v1320, %v1984
        %v2057 = vadd.f32 %v1321, %v1989
        %v2058 = vadd.f32 %v1322, %v1994
        %v2059 = vadd.f32 %v1323, %v1999
        %v2060 = vadd.f32 %v1324, %v2004
        %v2061 = vadd.f32 %v1325, %v2009
        %v2062 = vadd.f32 %v1326, %v2014
        %v2063 = vadd.f32 %v1327, %v2019
        %v2064 = vadd.f32 %v1328, %v2024
        %v2065 = vadd.f32 %v1329, %v2029
        %v2066 = vadd.f32 %v1330, %v2034
        %vm2067 = vcmask 7168
        %2068 = vst.msk [vmem:[#allocation3] sm:$0xff] %vm2067, %v2035
        %2069 = vst.msk [vmem:[#allocation3 + $0x8] sm:$0xff] %vm2067, %v2036
        %2070 = vst.msk [vmem:[#allocation3 + $0x10] sm:$0xff] %vm2067, %v2037
        %2071 = vst.msk [vmem:[#allocation3 + $0x18] sm:$0xff] %vm2067, %v2038
        %2072 = vst.msk [vmem:[#allocation3 + $0x20] sm:$0xff] %vm2067, %v2039
        %2073 = vst.msk [vmem:[#allocation3 + $0x28] sm:$0xff] %vm2067, %v2040
        %2074 = vst.msk [vmem:[#allocation3 + $0x30] sm:$0xff] %vm2067, %v2041
        %2075 = vst.msk [vmem:[#allocation3 + $0x38] sm:$0xff] %vm2067, %v2042
        %2076 = vst.msk [vmem:[#allocation3 + $0x40] sm:$0xff] %vm2067, %v2043
        %2077 = vst.msk [vmem:[#allocation3 + $0x48] sm:$0xff] %vm2067, %v2044
        %2078 = vst.msk [vmem:[#allocation3 + $0x50] sm:$0xff] %vm2067, %v2045
        %2079 = vst.msk [vmem:[#allocation3 + $0x58] sm:$0xff] %vm2067, %v2046
        %2080 = vst.msk [vmem:[#allocation3 + $0x60] sm:$0xff] %vm2067, %v2047
        %2081 = vst.msk [vmem:[#allocation3 + $0x68] sm:$0xff] %vm2067, %v2048
        %2082 = vst.msk [vmem:[#allocation3 + $0x70] sm:$0xff] %vm2067, %v2049
        %2083 = vst.msk [vmem:[#allocation3 + $0x78] sm:$0xff] %vm2067, %v2050
        %2084 = vst.msk [vmem:[#allocation3 + $0x80] sm:$0xff] %vm2067, %v2051
        %2085 = vst.msk [vmem:[#allocation3 + $0x88] sm:$0xff] %vm2067, %v2052
        %2086 = vst.msk [vmem:[#allocation3 + $0x90] sm:$0xff] %vm2067, %v2053
        %2087 = vst.msk [vmem:[#allocation3 + $0x98] sm:$0xff] %vm2067, %v2054
        %2088 = vst.msk [vmem:[#allocation3 + $0xa0] sm:$0xff] %vm2067, %v2055
        %2089 = vst.msk [vmem:[#allocation3 + $0xa8] sm:$0xff] %vm2067, %v2056
        %2090 = vst.msk [vmem:[#allocation3 + $0xb0] sm:$0xff] %vm2067, %v2057
        %2091 = vst.msk [vmem:[#allocation3 + $0xb8] sm:$0xff] %vm2067, %v2058
        %2092 = vst.msk [vmem:[#allocation3 + $0xc0] sm:$0xff] %vm2067, %v2059
        %2093 = vst.msk [vmem:[#allocation3 + $0xc8] sm:$0xff] %vm2067, %v2060
        %2094 = vst.msk [vmem:[#allocation3 + $0xd0] sm:$0xff] %vm2067, %v2061
        %2095 = vst.msk [vmem:[#allocation3 + $0xd8] sm:$0xff] %vm2067, %v2062
        %2096 = vst.msk [vmem:[#allocation3 + $0xe0] sm:$0xff] %vm2067, %v2063
        %2097 = vst.msk [vmem:[#allocation3 + $0xe8] sm:$0xff] %vm2067, %v2064
        %2098 = vst.msk [vmem:[#allocation3 + $0xf0] sm:$0xff] %vm2067, %v2065
        %2099 = vst.msk [vmem:[#allocation3 + $0xf8] sm:$0xff] %vm2067, %v2066
        %2100 = vst.msk [vmem:[#allocation2] sm:$0xff] %vm2067, %v1139
        %2101 = vst.msk [vmem:[#allocation2 + $0x8] sm:$0xff] %vm2067, %v1140
        %2102 = vst.msk [vmem:[#allocation2 + $0x10] sm:$0xff] %vm2067, %v1141
        %2103 = vst.msk [vmem:[#allocation2 + $0x18] sm:$0xff] %vm2067, %v1142
        %2104 = vst.msk [vmem:[#allocation2 + $0x20] sm:$0xff] %vm2067, %v1143
        %2105 = vst.msk [vmem:[#allocation2 + $0x28] sm:$0xff] %vm2067, %v1144
        %2106 = vst.msk [vmem:[#allocation2 + $0x30] sm:$0xff] %vm2067, %v1145
        %2107 = vst.msk [vmem:[#allocation2 + $0x38] sm:$0xff] %vm2067, %v1146
        %2108 = vst.msk [vmem:[#allocation2 + $0x40] sm:$0xff] %vm2067, %v1147
        %2109 = vst.msk [vmem:[#allocation2 + $0x48] sm:$0xff] %vm2067, %v1148
        %2110 = vst.msk [vmem:[#allocation2 + $0x50] sm:$0xff] %vm2067, %v1149
        %2111 = vst.msk [vmem:[#allocation2 + $0x58] sm:$0xff] %vm2067, %v1150
        %2112 = vst.msk [vmem:[#allocation2 + $0x60] sm:$0xff] %vm2067, %v1151
        %2113 = vst.msk [vmem:[#allocation2 + $0x68] sm:$0xff] %vm2067, %v1152
        %2114 = vst.msk [vmem:[#allocation2 + $0x70] sm:$0xff] %vm2067, %v1153
        %2115 = vst.msk [vmem:[#allocation2 + $0x78] sm:$0xff] %vm2067, %v1154
        %2116 = vst.msk [vmem:[#allocation2 + $0x80] sm:$0xff] %vm2067, %v1155
        %2117 = vst.msk [vmem:[#allocation2 + $0x88] sm:$0xff] %vm2067, %v1156
        %2118 = vst.msk [vmem:[#allocation2 + $0x90] sm:$0xff] %vm2067, %v1157
        %2119 = vst.msk [vmem:[#allocation2 + $0x98] sm:$0xff] %vm2067, %v1158
        %2120 = vst.msk [vmem:[#allocation2 + $0xa0] sm:$0xff] %vm2067, %v1159
        %2121 = vst.msk [vmem:[#allocation2 + $0xa8] sm:$0xff] %vm2067, %v1160
        %2122 = vst.msk [vmem:[#allocation2 + $0xb0] sm:$0xff] %vm2067, %v1161
        %2123 = vst.msk [vmem:[#allocation2 + $0xb8] sm:$0xff] %vm2067, %v1162
        %2124 = vst.msk [vmem:[#allocation2 + $0xc0] sm:$0xff] %vm2067, %v1163
        %2125 = vst.msk [vmem:[#allocation2 + $0xc8] sm:$0xff] %vm2067, %v1164
        %2126 = vst.msk [vmem:[#allocation2 + $0xd0] sm:$0xff] %vm2067, %v1165
        %2127 = vst.msk [vmem:[#allocation2 + $0xd8] sm:$0xff] %vm2067, %v1166
        %2128 = vst.msk [vmem:[#allocation2 + $0xe0] sm:$0xff] %vm2067, %v1167
        %2129 = vst.msk [vmem:[#allocation2 + $0xe8] sm:$0xff] %vm2067, %v1168
        %2130 = vst.msk [vmem:[#allocation2 + $0xf0] sm:$0xff] %vm2067, %v1169
        %2131 = vst.msk [vmem:[#allocation2 + $0xf8] sm:$0xff] %vm2067, %v1170
        %p2132 = scmp.eq.s32.totalorder %s19, 1
        // Predicated region
        $region60: #{tpu_custom_call.1} parent=50 // pred_check
          %p2133 = pneg %p2132
        $region61: #{tpu_custom_call.1} parent=50 // pred_check_branch
          %2135 = sbr.rel (%p2133) target = $region63
        $region62: #{tpu_custom_call.1} parent=50 // pred_region
          %v2136 = vld [vmem:[#allocation2] sm:$0xff]
          %v2137 = vld [vmem:[#allocation2 + $0x8] sm:$0xff]
          %v2138 = vld [vmem:[#allocation2 + $0x10] sm:$0xff]
          %v2139 = vld [vmem:[#allocation2 + $0x18] sm:$0xff]
          %v2140 = vld [vmem:[#allocation2 + $0x20] sm:$0xff]
          %v2141 = vld [vmem:[#allocation2 + $0x28] sm:$0xff]
          %v2142 = vld [vmem:[#allocation2 + $0x30] sm:$0xff]
          %v2143 = vld [vmem:[#allocation2 + $0x38] sm:$0xff]
          %v2144 = vld [vmem:[#allocation2 + $0x40] sm:$0xff]
          %v2145 = vld [vmem:[#allocation2 + $0x48] sm:$0xff]
          %v2146 = vld [vmem:[#allocation2 + $0x50] sm:$0xff]
          %v2147 = vld [vmem:[#allocation2 + $0x58] sm:$0xff]
          %v2148 = vld [vmem:[#allocation2 + $0x60] sm:$0xff]
          %v2149 = vld [vmem:[#allocation2 + $0x68] sm:$0xff]
          %v2150 = vld [vmem:[#allocation2 + $0x70] sm:$0xff]
          %v2151 = vld [vmem:[#allocation2 + $0x78] sm:$0xff]
          %v2152 = vld [vmem:[#allocation2 + $0x80] sm:$0xff]
          %v2153 = vld [vmem:[#allocation2 + $0x88] sm:$0xff]
          %v2154 = vld [vmem:[#allocation2 + $0x90] sm:$0xff]
          %v2155 = vld [vmem:[#allocation2 + $0x98] sm:$0xff]
          %v2156 = vld [vmem:[#allocation2 + $0xa0] sm:$0xff]
          %v2157 = vld [vmem:[#allocation2 + $0xa8] sm:$0xff]
          %v2158 = vld [vmem:[#allocation2 + $0xb0] sm:$0xff]
          %v2159 = vld [vmem:[#allocation2 + $0xb8] sm:$0xff]
          %v2160 = vld [vmem:[#allocation2 + $0xc0] sm:$0xff]
          %v2161 = vld [vmem:[#allocation2 + $0xc8] sm:$0xff]
          %v2162 = vld [vmem:[#allocation2 + $0xd0] sm:$0xff]
          %v2163 = vld [vmem:[#allocation2 + $0xd8] sm:$0xff]
          %v2164 = vld [vmem:[#allocation2 + $0xe0] sm:$0xff]
          %v2165 = vld [vmem:[#allocation2 + $0xe8] sm:$0xff]
          %v2166 = vld [vmem:[#allocation2 + $0xf0] sm:$0xff]
          %v2167 = vld [vmem:[#allocation2 + $0xf8] sm:$0xff]
          %v2168 = vld [vmem:[#allocation3] sm:$0xff]
          %v2169 = vld [vmem:[#allocation3 + $0x8] sm:$0xff]
          %v2170 = vld [vmem:[#allocation3 + $0x10] sm:$0xff]
          %v2171 = vld [vmem:[#allocation3 + $0x18] sm:$0xff]
          %v2172 = vld [vmem:[#allocation3 + $0x20] sm:$0xff]
          %v2173 = vld [vmem:[#allocation3 + $0x28] sm:$0xff]
          %v2174 = vld [vmem:[#allocation3 + $0x30] sm:$0xff]
          %v2175 = vld [vmem:[#allocation3 + $0x38] sm:$0xff]
          %v2176 = vld [vmem:[#allocation3 + $0x40] sm:$0xff]
          %v2177 = vld [vmem:[#allocation3 + $0x48] sm:$0xff]
          %v2178 = vld [vmem:[#allocation3 + $0x50] sm:$0xff]
          %v2179 = vld [vmem:[#allocation3 + $0x58] sm:$0xff]
          %v2180 = vld [vmem:[#allocation3 + $0x60] sm:$0xff]
          %v2181 = vld [vmem:[#allocation3 + $0x68] sm:$0xff]
          %v2182 = vld [vmem:[#allocation3 + $0x70] sm:$0xff]
          %v2183 = vld [vmem:[#allocation3 + $0x78] sm:$0xff]
          %v2184 = vld [vmem:[#allocation3 + $0x80] sm:$0xff]
          %v2185 = vld [vmem:[#allocation3 + $0x88] sm:$0xff]
          %v2186 = vld [vmem:[#allocation3 + $0x90] sm:$0xff]
          %v2187 = vld [vmem:[#allocation3 + $0x98] sm:$0xff]
          %v2188 = vld [vmem:[#allocation3 + $0xa0] sm:$0xff]
          %v2189 = vld [vmem:[#allocation3 + $0xa8] sm:$0xff]
          %v2190 = vld [vmem:[#allocation3 + $0xb0] sm:$0xff]
          %v2191 = vld [vmem:[#allocation3 + $0xb8] sm:$0xff]
          %v2192 = vld [vmem:[#allocation3 + $0xc0] sm:$0xff]
          %v2193 = vld [vmem:[#allocation3 + $0xc8] sm:$0xff]
          %v2194 = vld [vmem:[#allocation3 + $0xd0] sm:$0xff]
          %v2195 = vld [vmem:[#allocation3 + $0xd8] sm:$0xff]
          %v2196 = vld [vmem:[#allocation3 + $0xe0] sm:$0xff]
          %v2197 = vld [vmem:[#allocation3 + $0xe8] sm:$0xff]
          %v2198 = vld [vmem:[#allocation3 + $0xf0] sm:$0xff]
          %v2199 = vld [vmem:[#allocation3 + $0xf8] sm:$0xff]
          %v2200 = vlog2.pop %v2168
          %v2201 = vmul.f32 %v2200, 0.6931472
          %v2202 = vlog2.pop %v2169
          %v2203 = vmul.f32 %v2202, 0.6931472
          %v2204 = vlog2.pop %v2170
          %v2205 = vmul.f32 %v2204, 0.6931472
          %v2206 = vlog2.pop %v2171
          %v2207 = vmul.f32 %v2206, 0.6931472
          %v2208 = vlog2.pop %v2172
          %v2209 = vmul.f32 %v2208, 0.6931472
          %v2210 = vlog2.pop %v2173
          %v2211 = vmul.f32 %v2210, 0.6931472
          %v2212 = vlog2.pop %v2174
          %v2213 = vmul.f32 %v2212, 0.6931472
          %v2214 = vlog2.pop %v2175
          %v2215 = vmul.f32 %v2214, 0.6931472
          %v2216 = vlog2.pop %v2176
          %v2217 = vmul.f32 %v2216, 0.6931472
          %v2218 = vlog2.pop %v2177
          %v2219 = vmul.f32 %v2218, 0.6931472
          %v2220 = vlog2.pop %v2178
          %v2221 = vmul.f32 %v2220, 0.6931472
          %v2222 = vlog2.pop %v2179
          %v2223 = vmul.f32 %v2222, 0.6931472
          %v2224 = vlog2.pop %v2180
          %v2225 = vmul.f32 %v2224, 0.6931472
          %v2226 = vlog2.pop %v2181
          %v2227 = vmul.f32 %v2226, 0.6931472
          %v2228 = vlog2.pop %v2182
          %v2229 = vmul.f32 %v2228, 0.6931472
          %v2230 = vlog2.pop %v2183
          %v2231 = vmul.f32 %v2230, 0.6931472
          %v2232 = vlog2.pop %v2184
          %v2233 = vmul.f32 %v2232, 0.6931472
          %v2234 = vlog2.pop %v2185
          %v2235 = vmul.f32 %v2234, 0.6931472
          %v2236 = vlog2.pop %v2186
          %v2237 = vmul.f32 %v2236, 0.6931472
          %v2238 = vlog2.pop %v2187
          %v2239 = vmul.f32 %v2238, 0.6931472
          %v2240 = vlog2.pop %v2188
          %v2241 = vmul.f32 %v2240, 0.6931472
          %v2242 = vlog2.pop %v2189
          %v2243 = vmul.f32 %v2242, 0.6931472
          %v2244 = vlog2.pop %v2190
          %v2245 = vmul.f32 %v2244, 0.6931472
          %v2246 = vlog2.pop %v2191
          %v2247 = vmul.f32 %v2246, 0.6931472
          %v2248 = vlog2.pop %v2192
          %v2249 = vmul.f32 %v2248, 0.6931472
          %v2250 = vlog2.pop %v2193
          %v2251 = vmul.f32 %v2250, 0.6931472
          %v2252 = vlog2.pop %v2194
          %v2253 = vmul.f32 %v2252, 0.6931472
          %v2254 = vlog2.pop %v2195
          %v2255 = vmul.f32 %v2254, 0.6931472
          %v2256 = vlog2.pop %v2196
          %v2257 = vmul.f32 %v2256, 0.6931472
          %v2258 = vlog2.pop %v2197
          %v2259 = vmul.f32 %v2258, 0.6931472
          %v2260 = vlog2.pop %v2198
          %v2261 = vmul.f32 %v2260, 0.6931472
          %v2262 = vlog2.pop %v2199
          %v2263 = vmul.f32 %v2262, 0.6931472
          %v2264 = vadd.f32 %v2136, %v2201
          %v2265 = vadd.f32 %v2137, %v2203
          %v2266 = vadd.f32 %v2138, %v2205
          %v2267 = vadd.f32 %v2139, %v2207
          %v2268 = vadd.f32 %v2140, %v2209
          %v2269 = vadd.f32 %v2141, %v2211
          %v2270 = vadd.f32 %v2142, %v2213
          %v2271 = vadd.f32 %v2143, %v2215
          %v2272 = vadd.f32 %v2144, %v2217
          %v2273 = vadd.f32 %v2145, %v2219
          %v2274 = vadd.f32 %v2146, %v2221
          %v2275 = vadd.f32 %v2147, %v2223
          %v2276 = vadd.f32 %v2148, %v2225
          %v2277 = vadd.f32 %v2149, %v2227
          %v2278 = vadd.f32 %v2150, %v2229
          %v2279 = vadd.f32 %v2151, %v2231
          %v2280 = vadd.f32 %v2152, %v2233
          %v2281 = vadd.f32 %v2153, %v2235
          %v2282 = vadd.f32 %v2154, %v2237
          %v2283 = vadd.f32 %v2155, %v2239
          %v2284 = vadd.f32 %v2156, %v2241
          %v2285 = vadd.f32 %v2157, %v2243
          %v2286 = vadd.f32 %v2158, %v2245
          %v2287 = vadd.f32 %v2159, %v2247
          %v2288 = vadd.f32 %v2160, %v2249
          %v2289 = vadd.f32 %v2161, %v2251
          %v2290 = vadd.f32 %v2162, %v2253
          %v2291 = vadd.f32 %v2163, %v2255
          %v2292 = vadd.f32 %v2164, %v2257
          %v2293 = vadd.f32 %v2165, %v2259
          %v2294 = vadd.f32 %v2166, %v2261
          %v2295 = vadd.f32 %v2167, %v2263
          %2296 = vst.msk [vmem:[%s258] sm:$0xff] %vm2067, %v2264
          %2297 = vst.msk [vmem:[%s258 + $0x8] sm:$0xff] %vm2067, %v2265
          %2298 = vst.msk [vmem:[%s258 + $0x10] sm:$0xff] %vm2067, %v2266
          %2299 = vst.msk [vmem:[%s258 + $0x18] sm:$0xff] %vm2067, %v2267
          %2300 = vst.msk [vmem:[%s258 + $0x20] sm:$0xff] %vm2067, %v2268
          %2301 = vst.msk [vmem:[%s258 + $0x28] sm:$0xff] %vm2067, %v2269
          %2302 = vst.msk [vmem:[%s258 + $0x30] sm:$0xff] %vm2067, %v2270
          %2303 = vst.msk [vmem:[%s258 + $0x38] sm:$0xff] %vm2067, %v2271
          %2304 = vst.msk [vmem:[%s258 + $0x40] sm:$0xff] %vm2067, %v2272
          %2305 = vst.msk [vmem:[%s258 + $0x48] sm:$0xff] %vm2067, %v2273
          %2306 = vst.msk [vmem:[%s258 + $0x50] sm:$0xff] %vm2067, %v2274
          %2307 = vst.msk [vmem:[%s258 + $0x58] sm:$0xff] %vm2067, %v2275
          %2308 = vst.msk [vmem:[%s258 + $0x60] sm:$0xff] %vm2067, %v2276
          %2309 = vst.msk [vmem:[%s258 + $0x68] sm:$0xff] %vm2067, %v2277
          %2310 = vst.msk [vmem:[%s258 + $0x70] sm:$0xff] %vm2067, %v2278
          %2311 = vst.msk [vmem:[%s258 + $0x78] sm:$0xff] %vm2067, %v2279
          %2312 = vst.msk [vmem:[%s258 + $0x80] sm:$0xff] %vm2067, %v2280
          %2313 = vst.msk [vmem:[%s258 + $0x88] sm:$0xff] %vm2067, %v2281
          %2314 = vst.msk [vmem:[%s258 + $0x90] sm:$0xff] %vm2067, %v2282
          %2315 = vst.msk [vmem:[%s258 + $0x98] sm:$0xff] %vm2067, %v2283
          %2316 = vst.msk [vmem:[%s258 + $0xa0] sm:$0xff] %vm2067, %v2284
          %2317 = vst.msk [vmem:[%s258 + $0xa8] sm:$0xff] %vm2067, %v2285
          %2318 = vst.msk [vmem:[%s258 + $0xb0] sm:$0xff] %vm2067, %v2286
          %2319 = vst.msk [vmem:[%s258 + $0xb8] sm:$0xff] %vm2067, %v2287
          %2320 = vst.msk [vmem:[%s258 + $0xc0] sm:$0xff] %vm2067, %v2288
          %2321 = vst.msk [vmem:[%s258 + $0xc8] sm:$0xff] %vm2067, %v2289
          %2322 = vst.msk [vmem:[%s258 + $0xd0] sm:$0xff] %vm2067, %v2290
          %2323 = vst.msk [vmem:[%s258 + $0xd8] sm:$0xff] %vm2067, %v2291
          %2324 = vst.msk [vmem:[%s258 + $0xe0] sm:$0xff] %vm2067, %v2292
          %2325 = vst.msk [vmem:[%s258 + $0xe8] sm:$0xff] %vm2067, %v2293
          %2326 = vst.msk [vmem:[%s258 + $0xf0] sm:$0xff] %vm2067, %v2294
          %2327 = vst.msk [vmem:[%s258 + $0xf8] sm:$0xff] %vm2067, %v2295
        $region63: #{tpu_custom_call.1} parent=50 // pred_fallthru
          _
        %s2328 = smul.u32 32, %s18
        %p2329 = scmp.lt.s32.totalorder %s2328, 31
        %s2330 = scalar_select %p2329, %s2328, 31
        %s2331 = smul.addr %s2330, 8
        %s2332 = scalar_lea.vmem %s3, %s2331
        // Predicated region
        $region64: #{tpu_custom_call.1} parent=50 // pred_check
          %p2333 = pneg %p122
        $region65: #{tpu_custom_call.1} parent=50 // pred_check_branch
          %2335 = sbr.rel (%p2333) target = $region67
        $region66: #{tpu_custom_call.1} parent=50 // pred_region
          %s2336 = smul.u32 32, %s18
        $region67: #{tpu_custom_call.1} parent=50 // pred_fallthru
          _
        // Predicated region
        $region68: #{tpu_custom_call.1} parent=50 // pred_check
          %p2337 = pneg %p122
        $region69: #{tpu_custom_call.1} parent=50 // pred_check_branch
          %2339 = sbr.rel (%p2337) target = $region71
        $region70: #{tpu_custom_call.1} parent=50 // pred_region
          %s2340 = smul.u32 32, %s18
          %p2341 = scmp.lt.s32.totalorder %s2340, 31
          %s2342 = scalar_select %p2341, %s2340, 31
          %s2343 = smul.addr %s2342, 8
          %s2344 = scalar_lea.vmem %s3, %s2343
        $region71: #{tpu_custom_call.1} parent=50 // pred_fallthru
          _
      $region51: #{tpu_custom_call.1} parent=5 // pred_fallthru
        _
      %p2345 = scmp.le.s32.totalorder 2, %s9
      // Predicated region
      $region72: #{tpu_custom_call.1} parent=5 // pred_check
        %p2346 = pneg %p2345
      $region73: #{tpu_custom_call.1} parent=5 // pred_check_branch
        %2348 = sbr.rel (%p2346) target = $region75
      $region74: #{tpu_custom_call.1} parent=5 // pred_region
        %s2349 = ssub.s32 %s9, 2
      $region75: #{tpu_custom_call.1} parent=5 // pred_fallthru
        _
    $region6: #{tpu_custom_call.1} parent=1 // loop_footer
      %s13 = sadd.s32 1, %s9
    $region7: #{tpu_custom_call.1} parent=1 // loop_footer_branch
      %8 = sbr.rel target = $region3
    $region8: #{tpu_custom_call.1} parent=1 // loop_exit
      _

</llo_original>
